<compile_context>
chip_gen: v6e
topology: v6e:2x2x1
jax: 0.10.0
libtpu: 0.0.40
codegen_flags: <defaults>
</compile_context>

<pallas_src>
import functools

import jax
import jax.numpy as jnp
from jax.experimental import pallas as pl
from jax.experimental.pallas import tpu as pltpu

_LANES = 128
_EPS = 1e-12


def _round_up(x, m):
    return ((x + m - 1) // m) * m


# --------------------------------------------------------------------------------------
# Kernel A: edge-parallel hyperbolic message kernel.
#   msg_e = logmap0(mobius_add(expmap0(e_o, c), expmap0(rel[etype_e], c), c), c)
#         = alpha_e * e_o + beta_e * rel[etype_e]      (alpha/beta per-edge scalars)
# Runs once per edge tile; rel / curvature gathered from VMEM-resident tables with a
# one-hot matmul on the otherwise-idle MXU.  Spare lane `n_real_cols` of the bf16 output
# is set to 1.0 so the aggregation matmul also yields the in-degree for free.
# --------------------------------------------------------------------------------------
def _msg_kernel(e_o_ref, etype_ref, rel_tbl_ref, c_row_ref, msg_ref, *, n_real_cols):
    te, rp = e_o_ref.shape
    n_rel_pad = rel_tbl_ref.shape[0]

    e_o = e_o_ref[...]                                               # [te, rp] f32

    # in-kernel relation / curvature gather
    one_hot = (etype_ref[...] ==
               jax.lax.broadcasted_iota(jnp.int32, (te, n_rel_pad), 1)
               ).astype(jnp.float32)                                 # [te, n_rel_pad]
    rel = jnp.dot(one_hot, rel_tbl_ref[...],
                  preferred_element_type=jnp.float32)                # [te, rp]   MXU
    c = jnp.maximum(jnp.sum(one_hot * c_row_ref[...],
                            axis=-1, keepdims=True), _EPS)           # [te, 1]
    sqrt_c = jnp.sqrt(c)

    # the only [te, rp] -> [te, 1] reductions needed (3 XLU passes total)
    eo2 = jnp.maximum(jnp.sum(e_o * e_o, axis=-1, keepdims=True), _EPS)
    rl2 = jnp.maximum(jnp.sum(rel * rel, axis=-1, keepdims=True), _EPS)
    eor = jnp.sum(e_o * rel, axis=-1, keepdims=True)

    def tanh_ratio(a):                                               # tanh(a)/a, [te,1]
        a = jnp.maximum(a, _EPS)
        return jnp.tanh(a) * pl.reciprocal(a, approx=True)           # EUP

    # expmap0 scales: x = sx*e_o, y = sy*rel
    sx = tanh_ratio(sqrt_c * jnp.sqrt(eo2))
    sy = tanh_ratio(sqrt_c * jnp.sqrt(rl2))

    # mobius_add(x, y, c) = A*e_o + B*rel  (all-scalar algebra)
    x2 = sx * sx * eo2
    y2 = sy * sy * rl2
    xy = sx * sy * eor
    den = jnp.maximum(1.0 + 2.0 * c * xy + c * c * x2 * y2, _EPS)
    a_coef = (1.0 + 2.0 * c * xy + c * y2) * sx / den                # exact divide
    b_coef = (1.0 - c * x2) * sy / den

    # logmap0(q, c): |q|^2 reconstructed from the same three reductions
    q2 = jnp.maximum(a_coef * a_coef * eo2 + 2.0 * a_coef * b_coef * eor
                     + b_coef * b_coef * rl2, _EPS)
    arg = jnp.maximum(sqrt_c * jnp.sqrt(q2), _EPS)
    z = jnp.minimum(arg, 1.0 - 1e-6)                                 # f32-safe artanh clip
    artanh = 0.5 * jnp.log((1.0 + z) / (1.0 - z))
    sq = artanh * pl.reciprocal(arg, approx=True)                    # EUP

    alpha = sq * a_coef
    beta = sq * b_coef
    msg = alpha * e_o + beta * rel                                   # [te, rp]

    # 1.0 into spare padded lane -> adj @ msg also produces the in-degree column
    deg_lane = jax.lax.broadcasted_iota(jnp.int32, (te, rp), 1) == n_real_cols
    msg_ref[...] = jnp.where(deg_lane, 1.0, msg).astype(msg_ref.dtype)


# --------------------------------------------------------------------------------------
# Kernel B: pure aggregation (fn.sum) + apply_func + self-loop + bias.
# grid = (node_tiles, edge_tiles), edge (reduction) axis last; bf16 MXU matmul into an
# f32 VMEM accumulator; adjacency built in-VMEM from the dst index row.
# --------------------------------------------------------------------------------------
def _agg_kernel(dst_ref, msg_ref, h_old_ref, bias_ref, out_ref, acc_ref, *,
                self_loop, n_real_cols):
    i = pl.program_id(0)
    e_idx = pl.program_id(1)
    n_e = pl.num_programs(1)
    tn = acc_ref.shape[0]
    te = dst_ref.shape[1]

    @pl.when(e_idx == 0)
    def _init():
        acc_ref[...] = jnp.zeros_like(acc_ref)

    # [tn, te] adjacency block: subtract the node-tile offset from the [1, te] dst row
    # (cheaper than adding it to the [tn, te] iota); padded edges carry dst = -1.
    local_dst = dst_ref[...] - i * tn                                # [1, te]
    row_ids = jax.lax.broadcasted_iota(jnp.int32, (tn, te), 0)       # [tn, te]
    adj = (local_dst == row_ids).astype(jnp.bfloat16)                # exact 0/1 in bf16
    acc_ref[...] += jnp.dot(adj, msg_ref[...],                       # msg already bf16
                            preferred_element_type=jnp.float32)

    @pl.when(e_idx == n_e - 1)
    def _finalize():
        acc = acc_ref[...]
        # in-degree sits in spare lane `n_real_cols` (written by the message kernel)
        lane = jax.lax.broadcasted_iota(jnp.int32, acc.shape, 1)
        deg = jnp.sum(jnp.where(lane == n_real_cols, acc, 0.0),
                      axis=-1, keepdims=True)                        # [tn, 1]
        norm = 1.0 / jnp.maximum(deg, 1.0)                           # g.ndata['norm']
        h_new = acc * norm                                           # apply_func
        if self_loop:
            h_new = jnp.where(deg > 0.0, h_new, h_old_ref[...])      # keep old repr
        out_ref[...] = h_new + bias_ref[...]
        # TODO(synk): F.dropout omitted -- layer uses dropout=0.0 (identity); would use
        #             pltpu.prng_seed / pltpu.prng_random_bits otherwise.


@functools.partial(jax.jit, static_argnames=("self_loop", "block_n", "block_e"))
def hyperbolic_layer(h, src, dst, etype, rel_emb, curv, bias, *,
                     self_loop=True, block_n=512, block_e=1024):
    """Forward of HyperbolicLayer.

    h:        [N, R] node features (g.ndata['h'])
    src, dst: [E]    edge endpoints
    etype:    [E]    edge relation ids (edges.data['type'])
    rel_emb:  [n_rel, R] per-relation translation (reason_fun params)
    curv:     [n_rel]    per-relation raw curvature (softplus'ed)
    bias:     [1, R]
    """
    N, R = h.shape
    E = src.shape[0]
    n_rel = rel_emb.shape[0]
    f32 = jnp.float32

    # lane-dense feature axis + one spare lane (column R) for the in-degree trick
    r_pad = _round_up(max(R + 1, _LANES), _LANES)
    n_rel_pad = _round_up(n_rel, _LANES)

    tn = min(block_n, _round_up(N, 8))
    # prefer >= 2 node tiles so the "parallel" node axis feeds both TensorCores on
    # megacore / v7x; a single node tile leaves one core idle.
    if _round_up(N, tn) // tn < 2 and N > 8:
        tn = _round_up((tn + 1) // 2, 8)
    te = min(block_e, _round_up(E, _LANES))
    n_pad = _round_up(N, tn)
    e_pad = _round_up(E, te)

    # Glue (padding + e_o gather) in plain JAX; padded edges: dst = -1 (never matched).
    h_pad = jnp.zeros((n_pad, r_pad), f32).at[:N, :R].set(h.astype(f32))
    rel_tbl = jnp.zeros((n_rel_pad, r_pad), f32).at[:n_rel, :R].set(rel_emb.astype(f32))
    c_row = jnp.zeros((1, n_rel_pad), f32).at[0, :n_rel].set(
        jax.nn.softplus(curv.astype(f32)))
    src_pad = jnp.zeros((e_pad,), jnp.int32).at[:E].set(src.astype(jnp.int32))
    dst_pad = jnp.full((e_pad,), -1, jnp.int32).at[:E].set(dst.astype(jnp.int32))
    etype_col = jnp.zeros((e_pad, 1), jnp.int32).at[:E, 0].set(etype.astype(jnp.int32))

    # TODO(synk): when N*r_pad*4 fits VMEM, keep h resident in-kernel and gather e_o
    #             from src ids there instead of this wrapper-side gather.
    e_o = h_pad[src_pad]                                   # edges.src['h']   [E_pad, Rp]
    dst2d = dst_pad[None, :]                               # [1, E_pad] int32
    bias_pad = jnp.zeros((1, r_pad), f32).at[:, :R].set(bias.astype(f32))

    vmem_limit = 48 * 1024 * 1024   # fits v7x (64 MiB physical) and v5e/v6e (128 MiB)

    # --- kernel A: hyperbolic message, computed exactly once per edge ---
    msg = pl.pallas_call(
        functools.partial(_msg_kernel, n_real_cols=R),
        out_shape=jax.ShapeDtypeStruct((e_pad, r_pad), jnp.bfloat16),
        grid_spec=pltpu.PrefetchScalarGridSpec(
            num_scalar_prefetch=0,
            grid=(e_pad // te,),
            in_specs=[
                pl.BlockSpec((te, r_pad), lambda e: (e, 0)),           # e_o edge stream
                pl.BlockSpec((te, 1), lambda e: (e, 0)),               # etype column
                pl.BlockSpec((n_rel_pad, r_pad), lambda e: (0, 0)),    # rel table (resident)
                pl.BlockSpec((1, n_rel_pad), lambda e: (0, 0)),        # softplus(curv) row
            ],
            out_specs=pl.BlockSpec((te, r_pad), lambda e: (e, 0))),
        compiler_params=pltpu.CompilerParams(
            dimension_semantics=("parallel",),
            vmem_limit_bytes=vmem_limit),
    )(e_o, etype_col, rel_tbl, c_row)

    # --- kernel B: fn.sum aggregation + apply_func + self-loop + bias ---
    out_pad = pl.pallas_call(
        functools.partial(_agg_kernel, self_loop=self_loop, n_real_cols=R),
        out_shape=jax.ShapeDtypeStruct((n_pad, r_pad), f32),
        grid_spec=pltpu.PrefetchScalarGridSpec(
            num_scalar_prefetch=0,
            grid=(n_pad // tn, e_pad // te),
            in_specs=[
                pl.BlockSpec((1, te), lambda i, e: (0, e)),            # dst indices
                pl.BlockSpec((te, r_pad), lambda i, e: (e, 0)),        # msg (bf16 stream)
                pl.BlockSpec((tn, r_pad), lambda i, e: (i, 0)),        # old h (node tile)
                pl.BlockSpec((1, r_pad), lambda i, e: (0, 0)),         # bias
            ],
            out_specs=pl.BlockSpec((tn, r_pad), lambda i, e: (i, 0)),
            scratch_shapes=[pltpu.VMEM((tn, r_pad), jnp.float32)]),    # f32 accumulator
        input_output_aliases={2: 0},                      # out aliases padded h (h_old)
        compiler_params=pltpu.CompilerParams(
            dimension_semantics=("parallel", "arbitrary"),
            vmem_limit_bytes=vmem_limit),
    )(dst2d, msg, h_pad, bias_pad)

    return out_pad[:N, :R]


if __name__ == "__main__":
    rank = 32
    n_relations = 4
    n_nodes = 16
    n_edges = 64
    init_size = 0.001

    key = jax.random.PRNGKey(0)
    k_h, k_rel, k_curv, k_src, k_dst, k_type = jax.random.split(key, 6)

    h = init_size * jax.random.normal(k_h, (n_nodes, rank), dtype=jnp.float32)
    rel_emb = init_size * jax.random.normal(k_rel, (n_relations, rank), dtype=jnp.float32)
    curv = jax.random.normal(k_curv, (n_relations,), dtype=jnp.float32)
    bias = jnp.zeros((1, rank), dtype=jnp.float32)      # nn.Parameter(torch.zeros((1, rank)))

    src = jax.random.randint(k_src, (n_edges,), 0, n_nodes, dtype=jnp.int32)
    dst = jax.random.randint(k_dst, (n_edges,), 0, n_nodes, dtype=jnp.int32)
    etype = jax.random.randint(k_type, (n_edges,), 0, n_relations, dtype=jnp.int32)

    out = hyperbolic_layer(h, src, dst, etype, rel_emb, curv, bias, self_loop=True)
    jax.block_until_ready(out)
    assert out.shape == (n_nodes, rank) and out.dtype == jnp.float32
    assert bool(jnp.all(jnp.isfinite(out)))
    print("KERNEL_OK")
</pallas_src>

<mosaic_0001>
module attributes {stable_mosaic.version = 11 : i64} {
  func.func @_msg_kernel(%arg0: i32, %arg1: memref<128x128xf32, #tpu.memory_space<vmem>>, %arg2: memref<128x1xi32, #tpu.memory_space<vmem>>, %arg3: memref<128x128xf32, #tpu.memory_space<vmem>>, %arg4: memref<1x128xf32, #tpu.memory_space<vmem>>, %arg5: memref<128x128xbf16, #tpu.memory_space<vmem>>) attributes {dimension_semantics = [#tpu.dimension_semantics<parallel>], iteration_bounds = array<i64: 1>, scalar_prefetch = 0 : i64, scratch_operands = 0 : i64, tpu.core_type = #tpu.core_type<tc>, window_params = [{transform_indices = @transform_0, window_bounds = array<i64: 128, 128>}, {transform_indices = @transform_1, window_bounds = array<i64: 128, 1>}, {pipeline_mode = #tpu.pipeline_mode<synchronous>, transform_indices = @transform_2, window_bounds = array<i64: 128, 128>}, {pipeline_mode = #tpu.pipeline_mode<synchronous>, transform_indices = @transform_3, window_bounds = array<i64: 1, 128>}, {transform_indices = @transform_4, window_bounds = array<i64: 128, 128>}]} {
    %c0 = arith.constant 0 : index
    %c0_0 = arith.constant 0 : index
    %0 = vector.load %arg1[%c0, %c0_0] : memref<128x128xf32, #tpu.memory_space<vmem>>, vector<128x128xf32>
    %c0_1 = arith.constant 0 : index
    %c0_2 = arith.constant 0 : index
    %1 = vector.load %arg2[%c0_1, %c0_2] : memref<128x1xi32, #tpu.memory_space<vmem>>, vector<128x1xi32>
    %2 = tpu.iota {dimensions = array<i32: 1>} : vector<128x128xi32>
    %3 = vector.broadcast %1 : vector<128x1xi32> to vector<128x128xi32>
    %4 = arith.cmpi eq, %3, %2 : vector<128x128xi32>
    %5 = arith.extui %4 : vector<128x128xi1> to vector<128x128xi32>
    %6 = arith.sitofp %5 : vector<128x128xi32> to vector<128x128xf32>
    %c0_3 = arith.constant 0 : index
    %c0_4 = arith.constant 0 : index
    %7 = vector.load %arg3[%c0_3, %c0_4] : memref<128x128xf32, #tpu.memory_space<vmem>>, vector<128x128xf32>
    %cst = arith.constant dense<0.000000e+00> : vector<128x128xf32>
    %8 = tpu.matmul %6, %7, %cst {dimension_numbers = #tpu.dot_dimension_numbers<[1], [0], [0], [1], [0, 0, 1, 1], [], []>} : vector<128x128xf32>, vector<128x128xf32>, vector<128x128xf32> -> vector<128x128xf32>
    %c0_5 = arith.constant 0 : index
    %c0_6 = arith.constant 0 : index
    %9 = vector.load %arg4[%c0_5, %c0_6] : memref<1x128xf32, #tpu.memory_space<vmem>>, vector<1x128xf32>
    %10 = vector.broadcast %9 : vector<1x128xf32> to vector<128x128xf32>
    %11 = arith.mulf %6, %10 : vector<128x128xf32>
    %cst_7 = arith.constant dense<0.000000e+00> : vector<128xf32>
    %12 = vector.multi_reduction <add>, %11, %cst_7 [1] : vector<128x128xf32> to vector<128xf32>
    %13 = vector.shape_cast %12 : vector<128xf32> to vector<128x1xf32>
    %cst_8 = arith.constant 9.99999996E-13 : f32
    %14 = vector.broadcast %cst_8 : f32 to vector<128x1xf32>
    %15 = arith.maximumf %13, %14 : vector<128x1xf32>
    %16 = math.sqrt %15 : vector<128x1xf32>
    %17 = arith.mulf %0, %0 : vector<128x128xf32>
    %cst_9 = arith.constant dense<0.000000e+00> : vector<128xf32>
    %18 = vector.multi_reduction <add>, %17, %cst_9 [1] : vector<128x128xf32> to vector<128xf32>
    %19 = vector.shape_cast %18 : vector<128xf32> to vector<128x1xf32>
    %cst_10 = arith.constant 9.99999996E-13 : f32
    %20 = vector.broadcast %cst_10 : f32 to vector<128x1xf32>
    %21 = arith.maximumf %19, %20 : vector<128x1xf32>
    %22 = arith.mulf %8, %8 : vector<128x128xf32>
    %cst_11 = arith.constant dense<0.000000e+00> : vector<128xf32>
    %23 = vector.multi_reduction <add>, %22, %cst_11 [1] : vector<128x128xf32> to vector<128xf32>
    %24 = vector.shape_cast %23 : vector<128xf32> to vector<128x1xf32>
    %cst_12 = arith.constant 9.99999996E-13 : f32
    %25 = vector.broadcast %cst_12 : f32 to vector<128x1xf32>
    %26 = arith.maximumf %24, %25 : vector<128x1xf32>
    %27 = arith.mulf %0, %8 : vector<128x128xf32>
    %cst_13 = arith.constant dense<0.000000e+00> : vector<128xf32>
    %28 = vector.multi_reduction <add>, %27, %cst_13 [1] : vector<128x128xf32> to vector<128xf32>
    %29 = vector.shape_cast %28 : vector<128xf32> to vector<128x1xf32>
    %30 = math.sqrt %21 : vector<128x1xf32>
    %31 = arith.mulf %16, %30 : vector<128x1xf32>
    %cst_14 = arith.constant 9.99999996E-13 : f32
    %32 = vector.broadcast %cst_14 : f32 to vector<128x1xf32>
    %33 = arith.maximumf %31, %32 : vector<128x1xf32>
    %34 = math.tanh %33 : vector<128x1xf32>
    %35 = tpu.reciprocal %33 {approx = true} : vector<128x1xf32> -> vector<128x1xf32>
    %36 = arith.mulf %34, %35 : vector<128x1xf32>
    %37 = math.sqrt %26 : vector<128x1xf32>
    %38 = arith.mulf %16, %37 : vector<128x1xf32>
    %cst_15 = arith.constant 9.99999996E-13 : f32
    %39 = vector.broadcast %cst_15 : f32 to vector<128x1xf32>
    %40 = arith.maximumf %38, %39 : vector<128x1xf32>
    %41 = math.tanh %40 : vector<128x1xf32>
    %42 = tpu.reciprocal %40 {approx = true} : vector<128x1xf32> -> vector<128x1xf32>
    %43 = arith.mulf %41, %42 : vector<128x1xf32>
    %44 = arith.mulf %36, %36 : vector<128x1xf32>
    %45 = arith.mulf %44, %21 : vector<128x1xf32>
    %46 = arith.mulf %43, %43 : vector<128x1xf32>
    %47 = arith.mulf %46, %26 : vector<128x1xf32>
    %48 = arith.mulf %36, %43 : vector<128x1xf32>
    %49 = arith.mulf %48, %29 : vector<128x1xf32>
    %cst_16 = arith.constant 2.000000e+00 : f32
    %50 = vector.broadcast %cst_16 : f32 to vector<128x1xf32>
    %51 = arith.mulf %50, %15 : vector<128x1xf32>
    %52 = arith.mulf %51, %49 : vector<128x1xf32>
    %cst_17 = arith.constant 1.000000e+00 : f32
    %53 = vector.broadcast %cst_17 : f32 to vector<128x1xf32>
    %54 = arith.addf %53, %52 : vector<128x1xf32>
    %55 = arith.mulf %15, %15 : vector<128x1xf32>
    %56 = arith.mulf %55, %45 : vector<128x1xf32>
    %57 = arith.mulf %56, %47 : vector<128x1xf32>
    %58 = arith.addf %54, %57 : vector<128x1xf32>
    %cst_18 = arith.constant 9.99999996E-13 : f32
    %59 = vector.broadcast %cst_18 : f32 to vector<128x1xf32>
    %60 = arith.maximumf %58, %59 : vector<128x1xf32>
    %cst_19 = arith.constant 2.000000e+00 : f32
    %61 = vector.broadcast %cst_19 : f32 to vector<128x1xf32>
    %62 = arith.mulf %61, %15 : vector<128x1xf32>
    %63 = arith.mulf %62, %49 : vector<128x1xf32>
    %cst_20 = arith.constant 1.000000e+00 : f32
    %64 = vector.broadcast %cst_20 : f32 to vector<128x1xf32>
    %65 = arith.addf %64, %63 : vector<128x1xf32>
    %66 = arith.mulf %15, %47 : vector<128x1xf32>
    %67 = arith.addf %65, %66 : vector<128x1xf32>
    %68 = arith.mulf %67, %36 : vector<128x1xf32>
    %69 = arith.divf %68, %60 : vector<128x1xf32>
    %70 = arith.mulf %15, %45 : vector<128x1xf32>
    %cst_21 = arith.constant 1.000000e+00 : f32
    %71 = vector.broadcast %cst_21 : f32 to vector<128x1xf32>
    %72 = arith.subf %71, %70 : vector<128x1xf32>
    %73 = arith.mulf %72, %43 : vector<128x1xf32>
    %74 = arith.divf %73, %60 : vector<128x1xf32>
    %75 = arith.mulf %69, %69 : vector<128x1xf32>
    %76 = arith.mulf %75, %21 : vector<128x1xf32>
    %cst_22 = arith.constant 2.000000e+00 : f32
    %77 = vector.broadcast %cst_22 : f32 to vector<128x1xf32>
    %78 = arith.mulf %77, %69 : vector<128x1xf32>
    %79 = arith.mulf %78, %74 : vector<128x1xf32>
    %80 = arith.mulf %79, %29 : vector<128x1xf32>
    %81 = arith.addf %76, %80 : vector<128x1xf32>
    %82 = arith.mulf %74, %74 : vector<128x1xf32>
    %83 = arith.mulf %82, %26 : vector<128x1xf32>
    %84 = arith.addf %81, %83 : vector<128x1xf32>
    %cst_23 = arith.constant 9.99999996E-13 : f32
    %85 = vector.broadcast %cst_23 : f32 to vector<128x1xf32>
    %86 = arith.maximumf %84, %85 : vector<128x1xf32>
    %87 = math.sqrt %86 : vector<128x1xf32>
    %88 = arith.mulf %16, %87 : vector<128x1xf32>
    %cst_24 = arith.constant 9.99999996E-13 : f32
    %89 = vector.broadcast %cst_24 : f32 to vector<128x1xf32>
    %90 = arith.maximumf %88, %89 : vector<128x1xf32>
    %cst_25 = arith.constant 0.999998986 : f32
    %91 = vector.broadcast %cst_25 : f32 to vector<128x1xf32>
    %92 = arith.minimumf %90, %91 : vector<128x1xf32>
    %cst_26 = arith.constant 1.000000e+00 : f32
    %93 = vector.broadcast %cst_26 : f32 to vector<128x1xf32>
    %94 = arith.addf %93, %92 : vector<128x1xf32>
    %cst_27 = arith.constant 1.000000e+00 : f32
    %95 = vector.broadcast %cst_27 : f32 to vector<128x1xf32>
    %96 = arith.subf %95, %92 : vector<128x1xf32>
    %97 = arith.divf %94, %96 : vector<128x1xf32>
    %98 = math.log %97 : vector<128x1xf32>
    %cst_28 = arith.constant 5.000000e-01 : f32
    %99 = vector.broadcast %cst_28 : f32 to vector<128x1xf32>
    %100 = arith.mulf %99, %98 : vector<128x1xf32>
    %101 = tpu.reciprocal %90 {approx = true} : vector<128x1xf32> -> vector<128x1xf32>
    %102 = arith.mulf %100, %101 : vector<128x1xf32>
    %103 = arith.mulf %102, %69 : vector<128x1xf32>
    %104 = arith.mulf %102, %74 : vector<128x1xf32>
    %105 = vector.broadcast %103 : vector<128x1xf32> to vector<128x128xf32>
    %106 = arith.mulf %105, %0 : vector<128x128xf32>
    %107 = vector.broadcast %104 : vector<128x1xf32> to vector<128x128xf32>
    %108 = arith.mulf %107, %8 : vector<128x128xf32>
    %109 = arith.addf %106, %108 : vector<128x128xf32>
    %110 = tpu.iota {dimensions = array<i32: 1>} : vector<128x128xi32>
    %c32_i32 = arith.constant 32 : i32
    %111 = vector.broadcast %c32_i32 : i32 to vector<128x128xi32>
    %112 = arith.cmpi eq, %110, %111 : vector<128x128xi32>
    %cst_29 = arith.constant 1.000000e+00 : f32
    %113 = vector.broadcast %cst_29 : f32 to vector<128x128xf32>
    %114 = arith.select %112, %113, %109 : vector<128x128xi1>, vector<128x128xf32>
    %115 = arith.truncf %114 : vector<128x128xf32> to vector<128x128xbf16>
    %c0_30 = arith.constant 0 : index
    %c0_31 = arith.constant 0 : index
    %116 = vector.load %arg5[%c0_30, %c0_31] : memref<128x128xbf16, #tpu.memory_space<vmem>>, vector<128x128xbf16>
    tpu.vector_store %arg5[%c0_30, %c0_31], %115 {strides = array<i32>} : memref<128x128xbf16, #tpu.memory_space<vmem>>, vector<128x128xbf16>,
    return
  }
  func.func @transform_0(%arg0: i32) -> (i32, i32) {
    %c0_i32 = arith.constant 0 : i32
    %c0_i32_0 = arith.constant 0 : i32
    return %arg0, %c0_i32 : i32, i32
  }
  func.func @transform_1(%arg0: i32) -> (i32, i32) {
    %c0_i32 = arith.constant 0 : i32
    %c0_i32_0 = arith.constant 0 : i32
    return %arg0, %c0_i32 : i32, i32
  }
  func.func @transform_2(%arg0: i32) -> (i32, i32) {
    %c0_i32 = arith.constant 0 : i32
    %c0_i32_0 = arith.constant 0 : i32
    %c0_i32_1 = arith.constant 0 : i32
    return %c0_i32, %c0_i32_0 : i32, i32
  }
  func.func @transform_3(%arg0: i32) -> (i32, i32) {
    %c0_i32 = arith.constant 0 : i32
    %c0_i32_0 = arith.constant 0 : i32
    %c0_i32_1 = arith.constant 0 : i32
    return %c0_i32, %c0_i32_0 : i32, i32
  }
  func.func @transform_4(%arg0: i32) -> (i32, i32) {
    %c0_i32 = arith.constant 0 : i32
    %c0_i32_0 = arith.constant 0 : i32
    return %arg0, %c0_i32 : i32, i32
  }
}

module attributes {stable_mosaic.version = 11 : i64} {
  func.func @_agg_kernel(%arg0: i32, %arg1: i32, %arg2: memref<1x128xi32, #tpu.memory_space<vmem>>, %arg3: memref<128x128xbf16, #tpu.memory_space<vmem>>, %arg4: memref<8x128xf32, #tpu.memory_space<vmem>>, %arg5: memref<1x128xf32, #tpu.memory_space<vmem>>, %arg6: memref<8x128xf32, #tpu.memory_space<vmem>>, %arg7: memref<8x128xf32, #tpu.memory_space<vmem>>) attributes {dimension_semantics = [#tpu.dimension_semantics<parallel>, #tpu.dimension_semantics<arbitrary>], iteration_bounds = array<i64: 2, 1>, scalar_prefetch = 0 : i64, scratch_operands = 1 : i64, tpu.core_type = #tpu.core_type<tc>, window_params = [{transform_indices = @transform_0, window_bounds = array<i64: 1, 128>}, {transform_indices = @transform_1, window_bounds = array<i64: 128, 128>}, {transform_indices = @transform_2, window_bounds = array<i64: 8, 128>}, {pipeline_mode = #tpu.pipeline_mode<synchronous>, transform_indices = @transform_3, window_bounds = array<i64: 1, 128>}, {transform_indices = @transform_4, window_bounds = array<i64: 8, 128>}]} {
    %c0_i32 = arith.constant 0 : i32
    %0 = arith.cmpi eq, %arg1, %c0_i32 : i32
    %1 = arith.extui %0 : i1 to i32
    %c0_i32_0 = arith.constant 0 : i32
    %2 = arith.cmpi ne, %1, %c0_i32_0 : i32
    scf.if %2 {
      %cst_10 = arith.constant 0.000000e+00 : f32
      %21 = vector.broadcast %cst_10 : f32 to vector<8x128xf32>
      %c0_11 = arith.constant 0 : index
      %c0_12 = arith.constant 0 : index
      %22 = vector.load %arg7[%c0_11, %c0_12] : memref<8x128xf32, #tpu.memory_space<vmem>>, vector<8x128xf32>
      tpu.vector_store %arg7[%c0_11, %c0_12], %21 {strides = array<i32>} : memref<8x128xf32, #tpu.memory_space<vmem>>, vector<8x128xf32>,
    } else {
    }
    %c0 = arith.constant 0 : index
    %c0_1 = arith.constant 0 : index
    %3 = vector.load %arg2[%c0, %c0_1] : memref<1x128xi32, #tpu.memory_space<vmem>>, vector<1x128xi32>
    %c8_i32 = arith.constant 8 : i32
    %4 = arith.muli %arg0, %c8_i32 : i32
    %5 = vector.broadcast %4 : i32 to vector<1x128xi32>
    %6 = arith.subi %3, %5 : vector<1x128xi32>
    %7 = tpu.iota {dimensions = array<i32: 0>} : vector<8x128xi32>
    %8 = vector.broadcast %6 : vector<1x128xi32> to vector<8x128xi32>
    %9 = arith.cmpi eq, %8, %7 : vector<8x128xi32>
    %10 = arith.extui %9 : vector<8x128xi1> to vector<8x128xi32>
    %11 = arith.sitofp %10 : vector<8x128xi32> to vector<8x128xf32>
    %12 = arith.truncf %11 : vector<8x128xf32> to vector<8x128xbf16>
    %c0_2 = arith.constant 0 : index
    %c0_3 = arith.constant 0 : index
    %13 = vector.load %arg7[%c0_2, %c0_3] : memref<8x128xf32, #tpu.memory_space<vmem>>, vector<8x128xf32>
    %c0_4 = arith.constant 0 : index
    %c0_5 = arith.constant 0 : index
    %14 = vector.load %arg3[%c0_4, %c0_5] : memref<128x128xbf16, #tpu.memory_space<vmem>>, vector<128x128xbf16>
    %cst = arith.constant dense<0.000000e+00> : vector<8x128xf32>
    %15 = tpu.matmul %12, %14, %cst {dimension_numbers = #tpu.dot_dimension_numbers<[1], [0], [0], [1], [0, 0, 1, 1], [], []>} : vector<8x128xbf16>, vector<128x128xbf16>, vector<8x128xf32> -> vector<8x128xf32>
    %16 = arith.addf %13, %15 : vector<8x128xf32>
    %c0_6 = arith.constant 0 : index
    %c0_7 = arith.constant 0 : index
    %17 = vector.load %arg7[%c0_6, %c0_7] : memref<8x128xf32, #tpu.memory_space<vmem>>, vector<8x128xf32>
    tpu.vector_store %arg7[%c0_6, %c0_7], %16 {strides = array<i32>} : memref<8x128xf32, #tpu.memory_space<vmem>>, vector<8x128xf32>,
    %c0_i32_8 = arith.constant 0 : i32
    %18 = arith.cmpi eq, %arg1, %c0_i32_8 : i32
    %19 = arith.extui %18 : i1 to i32
    %c0_i32_9 = arith.constant 0 : i32
    %20 = arith.cmpi ne, %19, %c0_i32_9 : i32
    scf.if %20 {
      %c0_10 = arith.constant 0 : index
      %c0_11 = arith.constant 0 : index
      %21 = vector.load %arg7[%c0_10, %c0_11] : memref<8x128xf32, #tpu.memory_space<vmem>>, vector<8x128xf32>
      %22 = tpu.iota {dimensions = array<i32: 1>} : vector<8x128xi32>
      %c32_i32 = arith.constant 32 : i32
      %23 = vector.broadcast %c32_i32 : i32 to vector<8x128xi32>
      %24 = arith.cmpi eq, %22, %23 : vector<8x128xi32>
      %cst_12 = arith.constant 0.000000e+00 : f32
      %25 = vector.broadcast %cst_12 : f32 to vector<8x128xf32>
      %26 = arith.select %24, %21, %25 : vector<8x128xi1>, vector<8x128xf32>
      %cst_13 = arith.constant dense<0.000000e+00> : vector<8xf32>
      %27 = vector.multi_reduction <add>, %26, %cst_13 [1] : vector<8x128xf32> to vector<8xf32>
      %28 = vector.shape_cast %27 : vector<8xf32> to vector<8x1xf32>
      %cst_14 = arith.constant 1.000000e+00 : f32
      %29 = vector.broadcast %cst_14 : f32 to vector<8x1xf32>
      %30 = arith.maximumf %28, %29 : vector<8x1xf32>
      %cst_15 = arith.constant 1.000000e+00 : f32
      %31 = vector.broadcast %cst_15 : f32 to vector<8x1xf32>
      %32 = arith.divf %31, %30 : vector<8x1xf32>
      %33 = vector.broadcast %32 : vector<8x1xf32> to vector<8x128xf32>
      %34 = arith.mulf %21, %33 : vector<8x128xf32>
      %cst_16 = arith.constant 0.000000e+00 : f32
      %35 = vector.broadcast %cst_16 : f32 to vector<8x1xf32>
      %36 = arith.cmpf ogt, %28, %35 : vector<8x1xf32>
      %c0_17 = arith.constant 0 : index
      %c0_18 = arith.constant 0 : index
      %37 = vector.load %arg4[%c0_17, %c0_18] : memref<8x128xf32, #tpu.memory_space<vmem>>, vector<8x128xf32>
      %38 = vector.shape_cast %36 : vector<8x1xi1> to vector<8x1xi1>
      %39 = vector.broadcast %38 : vector<8x1xi1> to vector<8x128xi1>
      %40 = arith.select %39, %34, %37 : vector<8x128xi1>, vector<8x128xf32>
      %c0_19 = arith.constant 0 : index
      %c0_20 = arith.constant 0 : index
      %41 = vector.load %arg5[%c0_19, %c0_20] : memref<1x128xf32, #tpu.memory_space<vmem>>, vector<1x128xf32>
      %42 = vector.broadcast %41 : vector<1x128xf32> to vector<8x128xf32>
      %43 = arith.addf %40, %42 : vector<8x128xf32>
      %c0_21 = arith.constant 0 : index
      %c0_22 = arith.constant 0 : index
      %44 = vector.load %arg6[%c0_21, %c0_22] : memref<8x128xf32, #tpu.memory_space<vmem>>, vector<8x128xf32>
      tpu.vector_store %arg6[%c0_21, %c0_22], %43 {strides = array<i32>} : memref<8x128xf32, #tpu.memory_space<vmem>>, vector<8x128xf32>,
    } else {
    }
    return
  }
  func.func @transform_0(%arg0: i32, %arg1: i32) -> (i32, i32) {
    %c0_i32 = arith.constant 0 : i32
    %c0_i32_0 = arith.constant 0 : i32
    return %c0_i32, %arg1 : i32, i32
  }
  func.func @transform_1(%arg0: i32, %arg1: i32) -> (i32, i32) {
    %c0_i32 = arith.constant 0 : i32
    %c0_i32_0 = arith.constant 0 : i32
    return %arg1, %c0_i32 : i32, i32
  }
  func.func @transform_2(%arg0: i32, %arg1: i32) -> (i32, i32) {
    %c0_i32 = arith.constant 0 : i32
    %c0_i32_0 = arith.constant 0 : i32
    return %arg0, %c0_i32 : i32, i32
  }
  func.func @transform_3(%arg0: i32, %arg1: i32) -> (i32, i32) {
    %c0_i32 = arith.constant 0 : i32
    %c0_i32_0 = arith.constant 0 : i32
    %c0_i32_1 = arith.constant 0 : i32
    return %c0_i32, %c0_i32_0 : i32, i32
  }
  func.func @transform_4(%arg0: i32, %arg1: i32) -> (i32, i32) {
    %c0_i32 = arith.constant 0 : i32
    %c0_i32_0 = arith.constant 0 : i32
    return %arg0, %c0_i32 : i32, i32
  }
}

</mosaic_0001>

<llo_original>
// kernel: hyperbolic_layer.3
$region0: #{hyperbolic_layer.3}
  #allocation0 [shape = 'u32[]', space=smem, size = 0x4, offset = 0x4, fixed_abs, tag = 'smem constant byte address 0x4 - core index']
  #allocation1 [shape = 'u32[144,128]{1,0:T(1,128)}', space=vmem, size = 0x12000, scoped, tag = 'internal scratch']
  #allocation2 [shape = 'f32[8,128]{1,0:T(8,128)}', space=vmem, size = 0x1000, scoped, tag = 'scratch operand']
  %s0 = inlined_call_operand.vmem [shape: s32[1,128], index: 0, kind: input, shape index: {}]
  %s1 = inlined_call_operand.vmem [shape: bf16[128,128], index: 1, kind: input, shape index: {}]
  %s2 = inlined_call_operand.vmem [shape: f32[16,128], index: 2, kind: input, shape index: {}, may-alias: {2,4}]
  %s3 = inlined_call_operand.vmem [shape: f32[1,128], index: 3, kind: input, shape index: {}]
  %s4 = inlined_call_operand.vmem [shape: f32[16,128], index: 4, kind: output, shape index: {}, may-alias: {2,4}]
  %s5 = sld [smem:[#allocation0]]
  $region57: #{hyperbolic_layer.3} parent=0
    _
  %s7 = ssub.s32 1, %s5
  %s8 = scalar_select 0, %s7, %s5
  loop: start=0, step=1, limit=4
  $region2: #{hyperbolic_layer.3} parent=0 // loop_pre_header
    _
  $region3: #{hyperbolic_layer.3} parent=0 // loop_header
    %s10 = sphi 0, %s14
    %p11 = scmp.ge.s32.totalorder %s10, 4
    %s17 = sphi 0, %s29
    %s18 = sphi 0, %s25
    %s19 = sphi 0, %s17
    %s20 = sphi 0, %s18
    %s21 = sphi 0, %s19
    %s22 = sphi 0, %s20
    %s32 = sphi 0, %s34
    %s35 = sphi 0, %s32
    %s36 = sphi 0, %s35
    %s52 = sphi 0, %s36
    %s58 = sphi 0, %s60
    %s61 = sphi 0, %s58
    %s62 = sphi 0, %s61
    %s78 = sphi 0, %s62
    %s84 = sphi 0, %s86
    %s87 = sphi 0, %s84
    %s88 = sphi 0, %s87
    %s104 = sphi 0, %s88
    %s108 = sphi 0, %s108
    %s110 = sphi 0, %s108
    %s111 = sphi 0, %s110
    %s125 = sphi 0, %s111
    %s131 = sphi 0, %s133
    %s134 = sphi 0, %s131
    %s135 = sphi 0, %s134
    %s151 = sphi 0, %s135
  $region4: #{hyperbolic_layer.3} parent=0 // loop_header_branch
    %13 = sbr.rel (%p11) target = $region8
  $region5: #{hyperbolic_layer.3} parent=0 // loop_body
    %s15 = ssub.s32 %s10, 1
    %s16 = ssub.s32 %s10, 2
    %s23 = sadd.s32 1, %s18
    %p24 = scmp.ge.s32.totalorder %s23, 1
    %s25 = scalar_select %p24, 0, %s23
    %s26 = sadd.s32 1, %s17
    %s27 = scalar_select %p24, %s26, %s17
    %p28 = scmp.ge.s32.totalorder %s27, 2
    %s29 = scalar_select %p28, 0, %s27
    %s30 = ssub.s32 %s18, %s25
    %p31 = scmp.eq.s32.totalorder %s30, 0
    %s33 = sadd.s32 %s32, 1
    %s34 = scalar_select %p31, %s32, %s33
    %p37 = pneg %p31
    %p38 = scmp.eq.s32.totalorder %s10, 1
    %p39 = por %p37, %p38
    %p40 = scmp.ne.s32.totalorder %s32, %s35
    %p41 = scmp.eq.s32.totalorder %s10, 0
    %p42 = por %p40, %p41
    %p43 = scmp.ne.s32.totalorder %s32, %s35
    %p44 = scmp.eq.s32.totalorder %s15, 1
    %p45 = por %p43, %p44
    %p46 = scmp.ne.s32.totalorder %s35, %s36
    %p47 = scmp.eq.s32.totalorder %s15, 0
    %p48 = por %p46, %p47
    %p49 = scmp.ne.s32.totalorder %s35, %s36
    %p50 = scmp.eq.s32.totalorder %s16, 1
    %p51 = por %p49, %p50
    %p53 = scmp.ne.s32.totalorder %s36, %s52
    %p54 = scmp.eq.s32.totalorder %s16, 0
    %p55 = por %p53, %p54
    %s56 = ssub.s32 %s18, %s25
    %p57 = scmp.eq.s32.totalorder %s56, 0
    %s59 = sadd.s32 %s58, 1
    %s60 = scalar_select %p57, %s58, %s59
    %p63 = pneg %p57
    %p64 = scmp.eq.s32.totalorder %s10, 1
    %p65 = por %p63, %p64
    %p66 = scmp.ne.s32.totalorder %s58, %s61
    %p67 = scmp.eq.s32.totalorder %s10, 0
    %p68 = por %p66, %p67
    %p69 = scmp.ne.s32.totalorder %s58, %s61
    %p70 = scmp.eq.s32.totalorder %s15, 1
    %p71 = por %p69, %p70
    %p72 = scmp.ne.s32.totalorder %s61, %s62
    %p73 = scmp.eq.s32.totalorder %s15, 0
    %p74 = por %p72, %p73
    %p75 = scmp.ne.s32.totalorder %s61, %s62
    %p76 = scmp.eq.s32.totalorder %s16, 1
    %p77 = por %p75, %p76
    %p79 = scmp.ne.s32.totalorder %s62, %s78
    %p80 = scmp.eq.s32.totalorder %s16, 0
    %p81 = por %p79, %p80
    %s82 = ssub.s32 %s17, %s29
    %p83 = scmp.eq.s32.totalorder %s82, 0
    %s85 = sadd.s32 %s84, 1
    %s86 = scalar_select %p83, %s84, %s85
    %p89 = pneg %p83
    %p90 = scmp.eq.s32.totalorder %s10, 1
    %p91 = por %p89, %p90
    %p92 = scmp.ne.s32.totalorder %s84, %s87
    %p93 = scmp.eq.s32.totalorder %s10, 0
    %p94 = por %p92, %p93
    %p95 = scmp.ne.s32.totalorder %s84, %s87
    %p96 = scmp.eq.s32.totalorder %s15, 1
    %p97 = por %p95, %p96
    %p98 = scmp.ne.s32.totalorder %s87, %s88
    %p99 = scmp.eq.s32.totalorder %s15, 0
    %p100 = por %p98, %p99
    %p101 = scmp.ne.s32.totalorder %s87, %s88
    %p102 = scmp.eq.s32.totalorder %s16, 1
    %p103 = por %p101, %p102
    %p105 = scmp.ne.s32.totalorder %s88, %s104
    %p106 = scmp.eq.s32.totalorder %s16, 0
    %p107 = por %p105, %p106
    %s109 = sadd.s32 %s108, 1
    %p112 = scmp.eq.s32.totalorder %s10, 1
    %p113 = scmp.ne.s32.totalorder %s108, %s110
    %p114 = scmp.eq.s32.totalorder %s10, 0
    %p115 = por %p113, %p114
    %p116 = scmp.ne.s32.totalorder %s108, %s110
    %p117 = scmp.eq.s32.totalorder %s15, 1
    %p118 = por %p116, %p117
    %p119 = scmp.ne.s32.totalorder %s110, %s111
    %p120 = scmp.eq.s32.totalorder %s15, 0
    %p121 = por %p119, %p120
    %p122 = scmp.ne.s32.totalorder %s110, %s111
    %p123 = scmp.eq.s32.totalorder %s16, 1
    %p124 = por %p122, %p123
    %p126 = scmp.ne.s32.totalorder %s111, %s125
    %p127 = scmp.eq.s32.totalorder %s16, 0
    %p128 = por %p126, %p127
    %s129 = ssub.s32 %s17, %s29
    %p130 = scmp.eq.s32.totalorder %s129, 0
    %s132 = sadd.s32 %s131, 1
    %s133 = scalar_select %p130, %s131, %s132
    %p136 = pneg %p130
    %p137 = scmp.eq.s32.totalorder %s10, 1
    %p138 = por %p136, %p137
    %p139 = scmp.ne.s32.totalorder %s131, %s134
    %p140 = scmp.eq.s32.totalorder %s10, 0
    %p141 = por %p139, %p140
    %p142 = scmp.ne.s32.totalorder %s131, %s134
    %p143 = scmp.eq.s32.totalorder %s15, 1
    %p144 = por %p142, %p143
    %p145 = scmp.ne.s32.totalorder %s134, %s135
    %p146 = scmp.eq.s32.totalorder %s15, 0
    %p147 = por %p145, %p146
    %p148 = scmp.ne.s32.totalorder %s134, %s135
    %p149 = scmp.eq.s32.totalorder %s16, 1
    %p150 = por %p148, %p149
    %p152 = scmp.ne.s32.totalorder %s135, %s151
    %p153 = scmp.eq.s32.totalorder %s16, 0
    %p154 = por %p152, %p153
    %p155 = scmp.le.s32.totalorder 1, %s10
    %p156 = scmp.lt.s32.totalorder %s10, 3
    %p157 = pnand %p155, %p156
    %p158 = pneg %p157
    // Predicated region
    $region9: #{hyperbolic_layer.3} parent=5 // pred_check
      _
    $region10: #{hyperbolic_layer.3} parent=5 // pred_check_branch
      %160 = sbr.rel (%p157) target = $region12
    $region11: #{hyperbolic_layer.3} parent=5 // pred_region
      %s161 = ssub.s32 %s10, 1
      // Predicated region
      $region13: #{hyperbolic_layer.3} parent=11 // pred_check
        %p162 = pneg %p48
      $region14: #{hyperbolic_layer.3} parent=11 // pred_check_branch
        %164 = sbr.rel (%p162) target = $region16
      $region15: #{hyperbolic_layer.3} parent=11 // pred_region
        %p165 = scmp.lt.s32.totalorder %s20, 0
        %s166 = scalar_select %p165, %s20, 0
        %s167 = scalar_lea.vmem %s0, %s166
      $region16: #{hyperbolic_layer.3} parent=11 // pred_fallthru
        _
      // Predicated region
      $region17: #{hyperbolic_layer.3} parent=11 // pred_check
        %p168 = pneg %p74
      $region18: #{hyperbolic_layer.3} parent=11 // pred_check_branch
        %170 = sbr.rel (%p168) target = $region20
      $region19: #{hyperbolic_layer.3} parent=11 // pred_region
        %s171 = smul.u32 16, %s20
        %p172 = scmp.lt.s32.totalorder %s171, 15
        %s173 = scalar_select %p172, %s171, 15
        %s174 = smul.addr %s173, 4
        %s175 = scalar_lea.vmem %s1, %s174
        %s176 = smul.u32 16, %s20
      $region20: #{hyperbolic_layer.3} parent=11 // pred_fallthru
        _
      // Predicated region
      $region21: #{hyperbolic_layer.3} parent=11 // pred_check
        %p177 = pneg %p121
      $region22: #{hyperbolic_layer.3} parent=11 // pred_check_branch
        %179 = sbr.rel (%p177) target = $region24
      $region23: #{hyperbolic_layer.3} parent=11 // pred_region
        _
      $region24: #{hyperbolic_layer.3} parent=11 // pred_fallthru
        _
    $region12: #{hyperbolic_layer.3} parent=5 // pred_fallthru
      _
    %p180 = scmp.lt.s32.totalorder %s10, 2
    // Predicated region
    $region25: #{hyperbolic_layer.3} parent=5 // pred_check
      %p181 = pneg %p180
    $region26: #{hyperbolic_layer.3} parent=5 // pred_check_branch
      %183 = sbr.rel (%p181) target = $region28
    $region27: #{hyperbolic_layer.3} parent=5 // pred_region
      // Predicated region
      $region29: #{hyperbolic_layer.3} parent=27 // pred_check
        %p184 = pneg %p94
      $region30: #{hyperbolic_layer.3} parent=27 // pred_check_branch
        %186 = sbr.rel (%p184) target = $region32
      $region31: #{hyperbolic_layer.3} parent=27 // pred_region
        %p187 = scmp.lt.s32.totalorder %s17, 1
        %s188 = scalar_select %p187, %s17, 1
        %s189 = smul.addr %s188, 8
        %s190 = scalar_lea.vmem %s2, %s189
      $region32: #{hyperbolic_layer.3} parent=27 // pred_fallthru
        _
    $region28: #{hyperbolic_layer.3} parent=5 // pred_fallthru
      _
    %p191 = scmp.le.s32.totalorder 1, %s10
    %p192 = scmp.lt.s32.totalorder %s10, 3
    %p193 = pnand %p191, %p192
    %p194 = pneg %p193
    // Predicated region
    $region33: #{hyperbolic_layer.3} parent=5 // pred_check
      _
    $region34: #{hyperbolic_layer.3} parent=5 // pred_check_branch
      %196 = sbr.rel (%p193) target = $region36
    $region35: #{hyperbolic_layer.3} parent=5 // pred_region
      %s197 = ssub.s32 %s10, 1
      %p198 = scmp.lt.s32.totalorder %s20, 0
      %s199 = scalar_select %p198, %s20, 0
      %s200 = scalar_lea.vmem %s0, %s199
      %p201 = pneg %p48
      %p202 = pneg %p45
      %s203 = smul.u32 16, %s20
      %p204 = scmp.lt.s32.totalorder %s203, 15
      %s205 = scalar_select %p204, %s203, 15
      %s206 = smul.addr %s205, 4
      %s207 = scalar_lea.vmem %s1, %s206
      %p208 = pneg %p74
      %p209 = pneg %p71
      %p210 = scmp.lt.s32.totalorder %s19, 1
      %s211 = scalar_select %p210, %s19, 1
      %s212 = smul.addr %s211, 8
      %s213 = scalar_lea.vmem %s2, %s212
      %p214 = pneg %p100
      %p215 = pneg %p97
      %p216 = pneg %p121
      %p217 = pneg %p118
      %p218 = pneg %p147
      %p219 = pneg %p144
      %p220 = scmp.lt.s32.totalorder %s19, 1
      %s221 = scalar_select %p220, %s19, 1
      %s222 = smul.addr %s221, 8
      %s223 = scalar_lea.vmem %s4, %s222
      %p224 = scmp.lt.s32.totalorder %s20, 0
      %s225 = scalar_select %p224, %s20, 0
      %s226 = scalar_lea.vmem %s0, %s225
      %s227 = smul.u32 16, %s20
      %p228 = scmp.lt.s32.totalorder %s227, 15
      %s229 = scalar_select %p228, %s227, 15
      %s230 = smul.addr %s229, 4
      %s231 = scalar_lea.vmem %s1, %s230
      %s232 = smul.u32 16, %s20
      %p233 = scmp.lt.s32.totalorder %s19, 1
      %s234 = scalar_select %p233, %s19, 1
      %s235 = smul.addr %s234, 8
      %s236 = scalar_lea.vmem %s2, %s235
      %p237 = scmp.lt.s32.totalorder %s19, 1
      %s238 = scalar_select %p237, %s19, 1
      %s239 = smul.addr %s238, 8
      %s240 = scalar_lea.vmem %s4, %s239
      %p242 = scmp.eq.s32.totalorder %s20, 0
      // Predicated region
      $region37: #{hyperbolic_layer.3} parent=35 // pred_check
        %p243 = pneg %p242
      $region38: #{hyperbolic_layer.3} parent=35 // pred_check_branch
        %245 = sbr.rel (%p243) target = $region40
      $region39: #{hyperbolic_layer.3} parent=35 // pred_region
        %246 = vst [vmem:[#allocation2] sm:$0xff] 0.0
      $region40: #{hyperbolic_layer.3} parent=35 // pred_fallthru
        _
      %v247 = vld [vmem:[%s226] sm:$0x1]
      %s248 = smul.u32 %s19, 8
      %v249 = vstv %s248
      %v250 = vsub.s32 %v247, %v249
      %v251 = vlaneseq
      %v252 = vshrl.u32 %v251, 7
      %v253 = vlaneseq
      %v254 = vshrl.u32 %v253, 7
      %v255 = vsub.s32 0, %v254
      %v256 = vrot.slane %v250, %v255
      %vm257 = vcmp.eq.s32.totalorder %v256, %v252
      %v258 = vsel %vm257, 1, 0
      %v259 = vcvt.s32.f32 %v258
      %v260 = vpack.c.bf16 %v259, %v259
      %v261 = vld [vmem:[#allocation2] sm:$0xff]
      %v262 = vld [vmem:[%s231] sm:$0xf]
      %v263 = vld [vmem:[%s231 + $0x4] sm:$0xf]
      %v264 = vld [vmem:[%s231 + $0x8] sm:$0xf]
      %v265 = vld [vmem:[%s231 + $0xc] sm:$0xf]
      %v266 = vld [vmem:[%s231 + $0x10] sm:$0xf]
      %v267 = vld [vmem:[%s231 + $0x14] sm:$0xf]
      %v268 = vld [vmem:[%s231 + $0x18] sm:$0xf]
      %v269 = vld [vmem:[%s231 + $0x1c] sm:$0xf]
      %v270 = vld [vmem:[%s231 + $0x20] sm:$0xf]
      %v271 = vld [vmem:[%s231 + $0x24] sm:$0xf]
      %v272 = vld [vmem:[%s231 + $0x28] sm:$0xf]
      %v273 = vld [vmem:[%s231 + $0x2c] sm:$0xf]
      %v274 = vld [vmem:[%s231 + $0x30] sm:$0xf]
      %v275 = vld [vmem:[%s231 + $0x34] sm:$0xf]
      %v276 = vld [vmem:[%s231 + $0x38] sm:$0xf]
      %v277 = vld [vmem:[%s231 + $0x3c] sm:$0xf]
      %v294 = vunpack.c.l.b16 %v262
      %v295 = vunpack.c.l.b16 %v263
      %v296 = vunpack.c.l.b16 %v264
      %v297 = vunpack.c.l.b16 %v265
      %v298 = vunpack.c.l.b16 %v266
      %v299 = vunpack.c.l.b16 %v267
      %v300 = vunpack.c.l.b16 %v268
      %v301 = vunpack.c.l.b16 %v269
      %v302 = vunpack.c.l.b16 %v270
      %v303 = vunpack.c.l.b16 %v271
      %v304 = vunpack.c.l.b16 %v272
      %v305 = vunpack.c.l.b16 %v273
      %v306 = vunpack.c.l.b16 %v274
      %v307 = vunpack.c.l.b16 %v275
      %v308 = vunpack.c.l.b16 %v276
      %v309 = vunpack.c.l.b16 %v277
      %v310 = vpack.c.b16 %v295, %v294
      %v311 = vpack.c.b16 %v297, %v296
      %v312 = vpack.c.b16 %v299, %v298
      %v313 = vpack.c.b16 %v301, %v300
      %v314 = vpack.c.b16 %v303, %v302
      %v315 = vpack.c.b16 %v305, %v304
      %v316 = vpack.c.b16 %v307, %v306
      %v317 = vpack.c.b16 %v309, %v308
      %326 = vmatprep.subr.bf16.mxu0 0
      %327 = vmatpush1.bf16.msra.mxu0 %v317
      %328 = vmatprep.subr.bf16.mxu0 0
      %329 = vmatpush1.bf16.msra.mxu0 %v316
      %330 = vmatprep.subr.bf16.mxu0 0
      %331 = vmatpush1.bf16.msra.mxu0 %v315
      %332 = vmatprep.subr.bf16.mxu0 0
      %333 = vmatpush1.bf16.msra.mxu0 %v314
      %334 = vmatprep.subr.bf16.mxu0 0
      %335 = vmatpush1.bf16.msra.mxu0 %v313
      %336 = vmatprep.subr.bf16.mxu0 0
      %337 = vmatpush1.bf16.msra.mxu0 %v312
      %338 = vmatprep.subr.bf16.mxu0 0
      %339 = vmatpush1.bf16.msra.mxu0 %v311
      %340 = vmatprep.subr.bf16.mxu0 0
      %341 = vmatpush1.bf16.msra.mxu0 %v310
      %342 = vmatprep.subr.bf16.mxu0 0
      %343 = vmatpush2.bf16.msra.mxu0 0
      %344 = vmatprep.subr.bf16.mxu0 0
      %345 = vmatpush2.bf16.msra.mxu0 0
      %346 = vmatprep.subr.bf16.mxu0 0
      %347 = vmatpush2.bf16.msra.mxu0 0
      %348 = vmatprep.subr.bf16.mxu0 0
      %349 = vmatpush2.bf16.msra.mxu0 0
      %350 = vmatprep.subr.bf16.mxu0 0
      %351 = vmatpush2.bf16.msra.mxu0 0
      %352 = vmatprep.subr.bf16.mxu0 0
      %353 = vmatpush2.bf16.msra.mxu0 0
      %354 = vmatprep.subr.bf16.mxu0 0
      %355 = vmatpush2.bf16.msra.mxu0 0
      %356 = vmatprep.subr.bf16.mxu0 0
      %357 = vmatpush2.bf16.msra.mxu0 0
      %358 = vmatprep.mubr.bf16.mxu0 0
      %359 = vmatmul.mubr.bf16.gmra.mxu0 %v260
      %v360 = vpop.f32.mrf.mxu0
      %v361 = vadd.f32 0.0, %v360
      %v362 = vpop.f32.mrf.mxu0
      %v363 = vpop.f32.mrf.mxu0
      %v364 = vpop.f32.mrf.mxu0
      %365 = vdwg.mxu0
      %v366 = vadd.f32 %v261, %v361
      %367 = vst [vmem:[#allocation2] sm:$0xff] %v366
      // Predicated region
      $region41: #{hyperbolic_layer.3} parent=35 // pred_check
        %p368 = pneg %p242
      $region42: #{hyperbolic_layer.3} parent=35 // pred_check_branch
        %370 = sbr.rel (%p368) target = $region44
      $region43: #{hyperbolic_layer.3} parent=35 // pred_region
        %v371 = vld [vmem:[#allocation2] sm:$0xff]
        %v372 = vlaneseq
        %v373 = vand.u32 %v372, 127
        %vm374 = vcmp.eq.s32.totalorder %v373, 32
        %v375 = vsel %vm374, %v371, 0.0
        %376 = vadd.xlane.f32.xlu0 %v375
        %v377 = vpop.xlane.xlu0 %376
        %v378 = vmax.f32 %v377, 1.0
        %v379 = vrcp.pop %v378
        %v380 = vmul.f32 1.0, %v379
        %v381 = vmul.f32 %v371, %v380
        %vm382 = vcmp.gt.f32.partialorder %v377, 0.0
        %v383 = vld [vmem:[%s236] sm:$0xff]
        %v384 = vsel %vm382, 1, 0
        %vm385 = vcmp.eq.s32.totalorder %v384, 1
        %v386 = vsel %vm385, %v381, %v383
        %v387 = vld [vmem:[%s3] sm:$0x1]
        %v389 = vlaneseq
        %v390 = vshrl.u32 %v389, 7
        %v391 = vsub.s32 0, %v390
        %v392 = vrot.slane %v387, %v391
        %v394 = vadd.f32 %v386, %v392
        %395 = vst [vmem:[%s240] sm:$0xff] %v394
      $region44: #{hyperbolic_layer.3} parent=35 // pred_fallthru
        _
      %p396 = scmp.lt.s32.totalorder %s19, 1
      %s397 = scalar_select %p396, %s19, 1
      %s398 = smul.addr %s397, 8
      %s399 = scalar_lea.vmem %s4, %s398
      // Predicated region
      $region45: #{hyperbolic_layer.3} parent=35 // pred_check
        %p400 = pneg %p144
      $region46: #{hyperbolic_layer.3} parent=35 // pred_check_branch
        %402 = sbr.rel (%p400) target = $region48
      $region47: #{hyperbolic_layer.3} parent=35 // pred_region
        _
      $region48: #{hyperbolic_layer.3} parent=35 // pred_fallthru
        _
    $region36: #{hyperbolic_layer.3} parent=5 // pred_fallthru
      _
    %p403 = scmp.le.s32.totalorder 2, %s10
    // Predicated region
    $region49: #{hyperbolic_layer.3} parent=5 // pred_check
      %p404 = pneg %p403
    $region50: #{hyperbolic_layer.3} parent=5 // pred_check_branch
      %406 = sbr.rel (%p404) target = $region52
    $region51: #{hyperbolic_layer.3} parent=5 // pred_region
      %s407 = ssub.s32 %s10, 2
      // Predicated region
      $region53: #{hyperbolic_layer.3} parent=51 // pred_check
        %p408 = pneg %p150
      $region54: #{hyperbolic_layer.3} parent=51 // pred_check_branch
        %410 = sbr.rel (%p408) target = $region56
      $region55: #{hyperbolic_layer.3} parent=51 // pred_region
        %p411 = scmp.lt.s32.totalorder %s21, 1
        %s412 = scalar_select %p411, %s21, 1
        %s413 = smul.addr %s412, 8
        %s414 = scalar_lea.vmem %s4, %s413
      $region56: #{hyperbolic_layer.3} parent=51 // pred_fallthru
        _
    $region52: #{hyperbolic_layer.3} parent=5 // pred_fallthru
      _
  $region6: #{hyperbolic_layer.3} parent=0 // loop_footer
    %s14 = sadd.s32 1, %s10
  $region7: #{hyperbolic_layer.3} parent=0 // loop_footer_branch
    %9 = sbr.rel target = $region3
  $region8: #{hyperbolic_layer.3} parent=0 // loop_exit
    _

// kernel: hyperbolic_layer.2
$region0: #{hyperbolic_layer.2}
  #allocation0 [shape = 'u32[]', space=smem, size = 0x4, offset = 0x4, fixed_abs, tag = 'smem constant byte address 0x4 - core index']
  #allocation1 [shape = 'u32[144,128]{1,0:T(1,128)}', space=vmem, size = 0x12000, scoped, tag = 'internal scratch']
  %s0 = inlined_call_operand.vmem [shape: f32[128,128], index: 0, kind: input, shape index: {}]
  %s1 = inlined_call_operand.vmem [shape: s32[128,1], index: 1, kind: input, shape index: {}]
  %s2 = inlined_call_operand.vmem [shape: f32[128,128], index: 2, kind: input, shape index: {}]
  %s3 = inlined_call_operand.vmem [shape: f32[1,128], index: 3, kind: input, shape index: {}]
  %s4 = inlined_call_operand.vmem [shape: bf16[128,128], index: 4, kind: output, shape index: {}]
  %s5 = sld [smem:[#allocation0]]
  $region26: #{hyperbolic_layer.2} parent=0
    _
  %s7 = ssub.s32 1, %s5
  %s8 = scalar_select 0, %s7, %s5
  // Predicated region
  $region2: #{hyperbolic_layer.2} parent=0 // pred_check
    _
  $region3: #{hyperbolic_layer.2} parent=0 // pred_check_branch
    %10 = sbr.rel (0) target = $region5
  $region4: #{hyperbolic_layer.2} parent=0 // pred_region
    _
  $region5: #{hyperbolic_layer.2} parent=0 // pred_fallthru
    _
  // Predicated region
  $region6: #{hyperbolic_layer.2} parent=0 // pred_check
    _
  $region7: #{hyperbolic_layer.2} parent=0 // pred_check_branch
    %12 = sbr.rel (0) target = $region9
  $region8: #{hyperbolic_layer.2} parent=0 // pred_region
    _
  $region9: #{hyperbolic_layer.2} parent=0 // pred_fallthru
    _
  // Predicated region
  $region10: #{hyperbolic_layer.2} parent=0 // pred_check
    _
  $region11: #{hyperbolic_layer.2} parent=0 // pred_check_branch
    %14 = sbr.rel (0) target = $region13
  $region12: #{hyperbolic_layer.2} parent=0 // pred_region
    _
  $region13: #{hyperbolic_layer.2} parent=0 // pred_fallthru
    _
  // Predicated region
  $region14: #{hyperbolic_layer.2} parent=0 // pred_check
    _
  $region15: #{hyperbolic_layer.2} parent=0 // pred_check_branch
    %16 = sbr.rel (0) target = $region17
  $region16: #{hyperbolic_layer.2} parent=0 // pred_region
    _
  $region17: #{hyperbolic_layer.2} parent=0 // pred_fallthru
    _
  %v17 = vld [vmem:[%s0] sm:$0xff]
  %v18 = vld [vmem:[%s0 + $0x8] sm:$0xff]
  %v19 = vld [vmem:[%s0 + $0x10] sm:$0xff]
  %v20 = vld [vmem:[%s0 + $0x18] sm:$0xff]
  %v21 = vld [vmem:[%s0 + $0x20] sm:$0xff]
  %v22 = vld [vmem:[%s0 + $0x28] sm:$0xff]
  %v23 = vld [vmem:[%s0 + $0x30] sm:$0xff]
  %v24 = vld [vmem:[%s0 + $0x38] sm:$0xff]
  %v25 = vld [vmem:[%s0 + $0x40] sm:$0xff]
  %v26 = vld [vmem:[%s0 + $0x48] sm:$0xff]
  %v27 = vld [vmem:[%s0 + $0x50] sm:$0xff]
  %v28 = vld [vmem:[%s0 + $0x58] sm:$0xff]
  %v29 = vld [vmem:[%s0 + $0x60] sm:$0xff]
  %v30 = vld [vmem:[%s0 + $0x68] sm:$0xff]
  %v31 = vld [vmem:[%s0 + $0x70] sm:$0xff]
  %v32 = vld [vmem:[%s0 + $0x78] sm:$0xff]
  %v33 = vld [vmem:[%s1] sm:$0xff]
  %v34 = vld [vmem:[%s1 + $0x8] sm:$0xff]
  %v35 = vld [vmem:[%s1 + $0x10] sm:$0xff]
  %v36 = vld [vmem:[%s1 + $0x18] sm:$0xff]
  %v37 = vld [vmem:[%s1 + $0x20] sm:$0xff]
  %v38 = vld [vmem:[%s1 + $0x28] sm:$0xff]
  %v39 = vld [vmem:[%s1 + $0x30] sm:$0xff]
  %v40 = vld [vmem:[%s1 + $0x38] sm:$0xff]
  %v41 = vld [vmem:[%s1 + $0x40] sm:$0xff]
  %v42 = vld [vmem:[%s1 + $0x48] sm:$0xff]
  %v43 = vld [vmem:[%s1 + $0x50] sm:$0xff]
  %v44 = vld [vmem:[%s1 + $0x58] sm:$0xff]
  %v45 = vld [vmem:[%s1 + $0x60] sm:$0xff]
  %v46 = vld [vmem:[%s1 + $0x68] sm:$0xff]
  %v47 = vld [vmem:[%s1 + $0x70] sm:$0xff]
  %v48 = vld [vmem:[%s1 + $0x78] sm:$0xff]
  %v49 = vlaneseq
  %v50 = vand.u32 %v49, 127
  %51 = vset.pattern.permute.xlu0 0
  %52 = vperm.xlu0 %51, %v33
  %v53 = vpop.permute.xlu0 %52
  %54 = vset.pattern.permute.xlu0 0
  %55 = vperm.xlu0 %54, %v34
  %v56 = vpop.permute.xlu0 %55
  %57 = vset.pattern.permute.xlu0 0
  %58 = vperm.xlu0 %57, %v35
  %v59 = vpop.permute.xlu0 %58
  %60 = vset.pattern.permute.xlu0 0
  %61 = vperm.xlu0 %60, %v36
  %v62 = vpop.permute.xlu0 %61
  %63 = vset.pattern.permute.xlu0 0
  %64 = vperm.xlu0 %63, %v37
  %v65 = vpop.permute.xlu0 %64
  %66 = vset.pattern.permute.xlu0 0
  %67 = vperm.xlu0 %66, %v38
  %v68 = vpop.permute.xlu0 %67
  %69 = vset.pattern.permute.xlu0 0
  %70 = vperm.xlu0 %69, %v39
  %v71 = vpop.permute.xlu0 %70
  %72 = vset.pattern.permute.xlu0 0
  %73 = vperm.xlu0 %72, %v40
  %v74 = vpop.permute.xlu0 %73
  %75 = vset.pattern.permute.xlu0 0
  %76 = vperm.xlu0 %75, %v41
  %v77 = vpop.permute.xlu0 %76
  %78 = vset.pattern.permute.xlu0 0
  %79 = vperm.xlu0 %78, %v42
  %v80 = vpop.permute.xlu0 %79
  %81 = vset.pattern.permute.xlu0 0
  %82 = vperm.xlu0 %81, %v43
  %v83 = vpop.permute.xlu0 %82
  %84 = vset.pattern.permute.xlu0 0
  %85 = vperm.xlu0 %84, %v44
  %v86 = vpop.permute.xlu0 %85
  %87 = vset.pattern.permute.xlu0 0
  %88 = vperm.xlu0 %87, %v45
  %v89 = vpop.permute.xlu0 %88
  %90 = vset.pattern.permute.xlu0 0
  %91 = vperm.xlu0 %90, %v46
  %v92 = vpop.permute.xlu0 %91
  %93 = vset.pattern.permute.xlu0 0
  %94 = vperm.xlu0 %93, %v47
  %v95 = vpop.permute.xlu0 %94
  %96 = vset.pattern.permute.xlu0 0
  %97 = vperm.xlu0 %96, %v48
  %v98 = vpop.permute.xlu0 %97
  %vm99 = vcmp.eq.s32.totalorder %v53, %v50
  %vm100 = vcmp.eq.s32.totalorder %v56, %v50
  %vm101 = vcmp.eq.s32.totalorder %v59, %v50
  %vm102 = vcmp.eq.s32.totalorder %v62, %v50
  %vm103 = vcmp.eq.s32.totalorder %v65, %v50
  %vm104 = vcmp.eq.s32.totalorder %v68, %v50
  %vm105 = vcmp.eq.s32.totalorder %v71, %v50
  %vm106 = vcmp.eq.s32.totalorder %v74, %v50
  %vm107 = vcmp.eq.s32.totalorder %v77, %v50
  %vm108 = vcmp.eq.s32.totalorder %v80, %v50
  %vm109 = vcmp.eq.s32.totalorder %v83, %v50
  %vm110 = vcmp.eq.s32.totalorder %v86, %v50
  %vm111 = vcmp.eq.s32.totalorder %v89, %v50
  %vm112 = vcmp.eq.s32.totalorder %v92, %v50
  %vm113 = vcmp.eq.s32.totalorder %v95, %v50
  %vm114 = vcmp.eq.s32.totalorder %v98, %v50
  %v115 = vsel %vm99, 1, 0
  %v116 = vsel %vm100, 1, 0
  %v117 = vsel %vm101, 1, 0
  %v118 = vsel %vm102, 1, 0
  %v119 = vsel %vm103, 1, 0
  %v120 = vsel %vm104, 1, 0
  %v121 = vsel %vm105, 1, 0
  %v122 = vsel %vm106, 1, 0
  %v123 = vsel %vm107, 1, 0
  %v124 = vsel %vm108, 1, 0
  %v125 = vsel %vm109, 1, 0
  %v126 = vsel %vm110, 1, 0
  %v127 = vsel %vm111, 1, 0
  %v128 = vsel %vm112, 1, 0
  %v129 = vsel %vm113, 1, 0
  %v130 = vsel %vm114, 1, 0
  %v131 = vcvt.s32.f32 %v115
  %v132 = vcvt.s32.f32 %v116
  %v133 = vcvt.s32.f32 %v117
  %v134 = vcvt.s32.f32 %v118
  %v135 = vcvt.s32.f32 %v119
  %v136 = vcvt.s32.f32 %v120
  %v137 = vcvt.s32.f32 %v121
  %v138 = vcvt.s32.f32 %v122
  %v139 = vcvt.s32.f32 %v123
  %v140 = vcvt.s32.f32 %v124
  %v141 = vcvt.s32.f32 %v125
  %v142 = vcvt.s32.f32 %v126
  %v143 = vcvt.s32.f32 %v127
  %v144 = vcvt.s32.f32 %v128
  %v145 = vcvt.s32.f32 %v129
  %v146 = vcvt.s32.f32 %v130
  %v147 = vld [vmem:[%s2] sm:$0xff]
  %v148 = vld [vmem:[%s2 + $0x8] sm:$0xff]
  %v149 = vld [vmem:[%s2 + $0x10] sm:$0xff]
  %v150 = vld [vmem:[%s2 + $0x18] sm:$0xff]
  %v151 = vld [vmem:[%s2 + $0x20] sm:$0xff]
  %v152 = vld [vmem:[%s2 + $0x28] sm:$0xff]
  %v153 = vld [vmem:[%s2 + $0x30] sm:$0xff]
  %v154 = vld [vmem:[%s2 + $0x38] sm:$0xff]
  %v155 = vld [vmem:[%s2 + $0x40] sm:$0xff]
  %v156 = vld [vmem:[%s2 + $0x48] sm:$0xff]
  %v157 = vld [vmem:[%s2 + $0x50] sm:$0xff]
  %v158 = vld [vmem:[%s2 + $0x58] sm:$0xff]
  %v159 = vld [vmem:[%s2 + $0x60] sm:$0xff]
  %v160 = vld [vmem:[%s2 + $0x68] sm:$0xff]
  %v161 = vld [vmem:[%s2 + $0x70] sm:$0xff]
  %v162 = vld [vmem:[%s2 + $0x78] sm:$0xff]
  %163 = vmatprep.subr.mxu0 0.0
  %164 = vmatpush1.msra.mxu0 %v162
  %165 = vmatprep.subr.mxu0 0.0
  %166 = vmatpush1.msra.mxu0 %v161
  %167 = vmatprep.subr.mxu0 0.0
  %168 = vmatpush1.msra.mxu0 %v160
  %169 = vmatprep.subr.mxu0 0.0
  %170 = vmatpush1.msra.mxu0 %v159
  %171 = vmatprep.subr.mxu0 0.0
  %172 = vmatpush1.msra.mxu0 %v158
  %173 = vmatprep.subr.mxu0 0.0
  %174 = vmatpush1.msra.mxu0 %v157
  %175 = vmatprep.subr.mxu0 0.0
  %176 = vmatpush1.msra.mxu0 %v156
  %177 = vmatprep.subr.mxu0 0.0
  %178 = vmatpush1.msra.mxu0 %v155
  %179 = vmatprep.subr.mxu0 0.0
  %180 = vmatpush1.msra.mxu0 %v154
  %181 = vmatprep.subr.mxu0 0.0
  %182 = vmatpush1.msra.mxu0 %v153
  %183 = vmatprep.subr.mxu0 0.0
  %184 = vmatpush1.msra.mxu0 %v152
  %185 = vmatprep.subr.mxu0 0.0
  %186 = vmatpush1.msra.mxu0 %v151
  %187 = vmatprep.subr.mxu0 0.0
  %188 = vmatpush1.msra.mxu0 %v150
  %189 = vmatprep.subr.mxu0 0.0
  %190 = vmatpush1.msra.mxu0 %v149
  %191 = vmatprep.subr.mxu0 0.0
  %192 = vmatpush1.msra.mxu0 %v148
  %193 = vmatprep.subr.mxu0 0.0
  %194 = vmatpush1.msra.mxu0 %v147
  %195 = vmatprep.subr.mxu0 0.0
  %196 = vmatpush2.msra.mxu0 0.0
  %197 = vmatprep.subr.mxu0 0.0
  %198 = vmatpush2.msra.mxu0 0.0
  %199 = vmatprep.subr.mxu0 0.0
  %200 = vmatpush2.msra.mxu0 0.0
  %201 = vmatprep.subr.mxu0 0.0
  %202 = vmatpush2.msra.mxu0 0.0
  %203 = vmatprep.subr.mxu0 0.0
  %204 = vmatpush2.msra.mxu0 0.0
  %205 = vmatprep.subr.mxu0 0.0
  %206 = vmatpush2.msra.mxu0 0.0
  %207 = vmatprep.subr.mxu0 0.0
  %208 = vmatpush2.msra.mxu0 0.0
  %209 = vmatprep.subr.mxu0 0.0
  %210 = vmatpush2.msra.mxu0 0.0
  %211 = vmatprep.subr.mxu0 0.0
  %212 = vmatpush2.msra.mxu0 0.0
  %213 = vmatprep.subr.mxu0 0.0
  %214 = vmatpush2.msra.mxu0 0.0
  %215 = vmatprep.subr.mxu0 0.0
  %216 = vmatpush2.msra.mxu0 0.0
  %217 = vmatprep.subr.mxu0 0.0
  %218 = vmatpush2.msra.mxu0 0.0
  %219 = vmatprep.subr.mxu0 0.0
  %220 = vmatpush2.msra.mxu0 0.0
  %221 = vmatprep.subr.mxu0 0.0
  %222 = vmatpush2.msra.mxu0 0.0
  %223 = vmatprep.subr.mxu0 0.0
  %224 = vmatpush2.msra.mxu0 0.0
  %225 = vmatprep.subr.mxu0 0.0
  %226 = vmatpush2.msra.mxu0 0.0
  %227 = vmatprep.mubr.f32.mxu0 0.0
  %228 = vmatmul.mubr.f32.gmra.mxu0 %v131
  %v229 = vpop.f32.mrf.mxu0
  %v230 = vadd.f32 0.0, %v229
  %v231 = vpop.f32.mrf.mxu0
  %232 = vmatprep.mubr.f32.mxu0 0.0
  %233 = vmatmul.mubr.f32.gmra.mxu0 %v132
  %v234 = vpop.f32.mrf.mxu0
  %v235 = vadd.f32 0.0, %v234
  %v236 = vpop.f32.mrf.mxu0
  %237 = vmatprep.mubr.f32.mxu0 0.0
  %238 = vmatmul.mubr.f32.gmra.mxu0 %v133
  %v239 = vpop.f32.mrf.mxu0
  %v240 = vadd.f32 0.0, %v239
  %v241 = vpop.f32.mrf.mxu0
  %242 = vmatprep.mubr.f32.mxu0 0.0
  %243 = vmatmul.mubr.f32.gmra.mxu0 %v134
  %v244 = vpop.f32.mrf.mxu0
  %v245 = vadd.f32 0.0, %v244
  %v246 = vpop.f32.mrf.mxu0
  %247 = vmatprep.mubr.f32.mxu0 0.0
  %248 = vmatmul.mubr.f32.gmra.mxu0 %v135
  %v249 = vpop.f32.mrf.mxu0
  %v250 = vadd.f32 0.0, %v249
  %v251 = vpop.f32.mrf.mxu0
  %252 = vmatprep.mubr.f32.mxu0 0.0
  %253 = vmatmul.mubr.f32.gmra.mxu0 %v136
  %v254 = vpop.f32.mrf.mxu0
  %v255 = vadd.f32 0.0, %v254
  %v256 = vpop.f32.mrf.mxu0
  %257 = vmatprep.mubr.f32.mxu0 0.0
  %258 = vmatmul.mubr.f32.gmra.mxu0 %v137
  %v259 = vpop.f32.mrf.mxu0
  %v260 = vadd.f32 0.0, %v259
  %v261 = vpop.f32.mrf.mxu0
  %262 = vmatprep.mubr.f32.mxu0 0.0
  %263 = vmatmul.mubr.f32.gmra.mxu0 %v138
  %v264 = vpop.f32.mrf.mxu0
  %v265 = vadd.f32 0.0, %v264
  %v266 = vpop.f32.mrf.mxu0
  %267 = vmatprep.mubr.f32.mxu0 0.0
  %268 = vmatmul.mubr.f32.gmra.mxu0 %v139
  %v269 = vpop.f32.mrf.mxu0
  %v270 = vadd.f32 0.0, %v269
  %v271 = vpop.f32.mrf.mxu0
  %272 = vmatprep.mubr.f32.mxu0 0.0
  %273 = vmatmul.mubr.f32.gmra.mxu0 %v140
  %v274 = vpop.f32.mrf.mxu0
  %v275 = vadd.f32 0.0, %v274
  %v276 = vpop.f32.mrf.mxu0
  %277 = vmatprep.mubr.f32.mxu0 0.0
  %278 = vmatmul.mubr.f32.gmra.mxu0 %v141
  %v279 = vpop.f32.mrf.mxu0
  %v280 = vadd.f32 0.0, %v279
  %v281 = vpop.f32.mrf.mxu0
  %282 = vmatprep.mubr.f32.mxu0 0.0
  %283 = vmatmul.mubr.f32.gmra.mxu0 %v142
  %v284 = vpop.f32.mrf.mxu0
  %v285 = vadd.f32 0.0, %v284
  %v286 = vpop.f32.mrf.mxu0
  %287 = vmatprep.mubr.f32.mxu0 0.0
  %288 = vmatmul.mubr.f32.gmra.mxu0 %v143
  %v289 = vpop.f32.mrf.mxu0
  %v290 = vadd.f32 0.0, %v289
  %v291 = vpop.f32.mrf.mxu0
  %292 = vmatprep.mubr.f32.mxu0 0.0
  %293 = vmatmul.mubr.f32.gmra.mxu0 %v144
  %v294 = vpop.f32.mrf.mxu0
  %v295 = vadd.f32 0.0, %v294
  %v296 = vpop.f32.mrf.mxu0
  %297 = vmatprep.mubr.f32.mxu0 0.0
  %298 = vmatmul.mubr.f32.gmra.mxu0 %v145
  %v299 = vpop.f32.mrf.mxu0
  %v300 = vadd.f32 0.0, %v299
  %v301 = vpop.f32.mrf.mxu0
  %302 = vmatprep.mubr.f32.mxu0 0.0
  %303 = vmatmul.mubr.f32.gmra.mxu0 %v146
  %v304 = vpop.f32.mrf.mxu0
  %v305 = vadd.f32 0.0, %v304
  %v306 = vpop.f32.mrf.mxu0
  %307 = vdwg.mxu0
  %v308 = vld [vmem:[%s3] sm:$0x1]
  %v310 = vlaneseq
  %v311 = vshrl.u32 %v310, 7
  %v312 = vsub.s32 0, %v311
  %v313 = vrot.slane %v308, %v312
  %v315 = vmul.f32 %v131, %v313
  %v316 = vmul.f32 %v132, %v313
  %v317 = vmul.f32 %v133, %v313
  %v318 = vmul.f32 %v134, %v313
  %v319 = vmul.f32 %v135, %v313
  %v320 = vmul.f32 %v136, %v313
  %v321 = vmul.f32 %v137, %v313
  %v322 = vmul.f32 %v138, %v313
  %v323 = vmul.f32 %v139, %v313
  %v324 = vmul.f32 %v140, %v313
  %v325 = vmul.f32 %v141, %v313
  %v326 = vmul.f32 %v142, %v313
  %v327 = vmul.f32 %v143, %v313
  %v328 = vmul.f32 %v144, %v313
  %v329 = vmul.f32 %v145, %v313
  %v330 = vmul.f32 %v146, %v313
  %331 = vadd.xlane.f32.xlu0 %v315
  %v332 = vpop.xlane.xlu0 %331
  %333 = vadd.xlane.f32.xlu0 %v316
  %v334 = vpop.xlane.xlu0 %333
  %335 = vadd.xlane.f32.xlu0 %v317
  %v336 = vpop.xlane.xlu0 %335
  %337 = vadd.xlane.f32.xlu0 %v318
  %v338 = vpop.xlane.xlu0 %337
  %339 = vadd.xlane.f32.xlu0 %v319
  %v340 = vpop.xlane.xlu0 %339
  %341 = vadd.xlane.f32.xlu0 %v320
  %v342 = vpop.xlane.xlu0 %341
  %343 = vadd.xlane.f32.xlu0 %v321
  %v344 = vpop.xlane.xlu0 %343
  %345 = vadd.xlane.f32.xlu0 %v322
  %v346 = vpop.xlane.xlu0 %345
  %347 = vadd.xlane.f32.xlu0 %v323
  %v348 = vpop.xlane.xlu0 %347
  %349 = vadd.xlane.f32.xlu0 %v324
  %v350 = vpop.xlane.xlu0 %349
  %351 = vadd.xlane.f32.xlu0 %v325
  %v352 = vpop.xlane.xlu0 %351
  %353 = vadd.xlane.f32.xlu0 %v326
  %v354 = vpop.xlane.xlu0 %353
  %355 = vadd.xlane.f32.xlu0 %v327
  %v356 = vpop.xlane.xlu0 %355
  %357 = vadd.xlane.f32.xlu0 %v328
  %v358 = vpop.xlane.xlu0 %357
  %359 = vadd.xlane.f32.xlu0 %v329
  %v360 = vpop.xlane.xlu0 %359
  %361 = vadd.xlane.f32.xlu0 %v330
  %v362 = vpop.xlane.xlu0 %361
  %v363 = vmax.f32 %v332, 1e-12
  %v364 = vmax.f32 %v334, 1e-12
  %v365 = vmax.f32 %v336, 1e-12
  %v366 = vmax.f32 %v338, 1e-12
  %v367 = vmax.f32 %v340, 1e-12
  %v368 = vmax.f32 %v342, 1e-12
  %v369 = vmax.f32 %v344, 1e-12
  %v370 = vmax.f32 %v346, 1e-12
  %v371 = vmax.f32 %v348, 1e-12
  %v372 = vmax.f32 %v350, 1e-12
  %v373 = vmax.f32 %v352, 1e-12
  %v374 = vmax.f32 %v354, 1e-12
  %v375 = vmax.f32 %v356, 1e-12
  %v376 = vmax.f32 %v358, 1e-12
  %v377 = vmax.f32 %v360, 1e-12
  %v378 = vmax.f32 %v362, 1e-12
  %v379 = vrsqrt.pop %v363
  %v380 = vmul.f32 %v363, %v379
  %vm381 = vcmp.eq.f32.partialorder %v363, inf
  %v382 = vsel %vm381, %v363, %v380
  %vm383 = vcmp.eq.f32.partialorder %v363, 0.0
  %v384 = vand.u32 %v363, 2147483648
  %v385 = vsel %vm383, %v384, %v382
  %v386 = vrsqrt.pop %v364
  %v387 = vmul.f32 %v364, %v386
  %vm388 = vcmp.eq.f32.partialorder %v364, inf
  %v389 = vsel %vm388, %v364, %v387
  %vm390 = vcmp.eq.f32.partialorder %v364, 0.0
  %v391 = vand.u32 %v364, 2147483648
  %v392 = vsel %vm390, %v391, %v389
  %v393 = vrsqrt.pop %v365
  %v394 = vmul.f32 %v365, %v393
  %vm395 = vcmp.eq.f32.partialorder %v365, inf
  %v396 = vsel %vm395, %v365, %v394
  %vm397 = vcmp.eq.f32.partialorder %v365, 0.0
  %v398 = vand.u32 %v365, 2147483648
  %v399 = vsel %vm397, %v398, %v396
  %v400 = vrsqrt.pop %v366
  %v401 = vmul.f32 %v366, %v400
  %vm402 = vcmp.eq.f32.partialorder %v366, inf
  %v403 = vsel %vm402, %v366, %v401
  %vm404 = vcmp.eq.f32.partialorder %v366, 0.0
  %v405 = vand.u32 %v366, 2147483648
  %v406 = vsel %vm404, %v405, %v403
  %v407 = vrsqrt.pop %v367
  %v408 = vmul.f32 %v367, %v407
  %vm409 = vcmp.eq.f32.partialorder %v367, inf
  %v410 = vsel %vm409, %v367, %v408
  %vm411 = vcmp.eq.f32.partialorder %v367, 0.0
  %v412 = vand.u32 %v367, 2147483648
  %v413 = vsel %vm411, %v412, %v410
  %v414 = vrsqrt.pop %v368
  %v415 = vmul.f32 %v368, %v414
  %vm416 = vcmp.eq.f32.partialorder %v368, inf
  %v417 = vsel %vm416, %v368, %v415
  %vm418 = vcmp.eq.f32.partialorder %v368, 0.0
  %v419 = vand.u32 %v368, 2147483648
  %v420 = vsel %vm418, %v419, %v417
  %v421 = vrsqrt.pop %v369
  %v422 = vmul.f32 %v369, %v421
  %vm423 = vcmp.eq.f32.partialorder %v369, inf
  %v424 = vsel %vm423, %v369, %v422
  %vm425 = vcmp.eq.f32.partialorder %v369, 0.0
  %v426 = vand.u32 %v369, 2147483648
  %v427 = vsel %vm425, %v426, %v424
  %v428 = vrsqrt.pop %v370
  %v429 = vmul.f32 %v370, %v428
  %vm430 = vcmp.eq.f32.partialorder %v370, inf
  %v431 = vsel %vm430, %v370, %v429
  %vm432 = vcmp.eq.f32.partialorder %v370, 0.0
  %v433 = vand.u32 %v370, 2147483648
  %v434 = vsel %vm432, %v433, %v431
  %v435 = vrsqrt.pop %v371
  %v436 = vmul.f32 %v371, %v435
  %vm437 = vcmp.eq.f32.partialorder %v371, inf
  %v438 = vsel %vm437, %v371, %v436
  %vm439 = vcmp.eq.f32.partialorder %v371, 0.0
  %v440 = vand.u32 %v371, 2147483648
  %v441 = vsel %vm439, %v440, %v438
  %v442 = vrsqrt.pop %v372
  %v443 = vmul.f32 %v372, %v442
  %vm444 = vcmp.eq.f32.partialorder %v372, inf
  %v445 = vsel %vm444, %v372, %v443
  %vm446 = vcmp.eq.f32.partialorder %v372, 0.0
  %v447 = vand.u32 %v372, 2147483648
  %v448 = vsel %vm446, %v447, %v445
  %v449 = vrsqrt.pop %v373
  %v450 = vmul.f32 %v373, %v449
  %vm451 = vcmp.eq.f32.partialorder %v373, inf
  %v452 = vsel %vm451, %v373, %v450
  %vm453 = vcmp.eq.f32.partialorder %v373, 0.0
  %v454 = vand.u32 %v373, 2147483648
  %v455 = vsel %vm453, %v454, %v452
  %v456 = vrsqrt.pop %v374
  %v457 = vmul.f32 %v374, %v456
  %vm458 = vcmp.eq.f32.partialorder %v374, inf
  %v459 = vsel %vm458, %v374, %v457
  %vm460 = vcmp.eq.f32.partialorder %v374, 0.0
  %v461 = vand.u32 %v374, 2147483648
  %v462 = vsel %vm460, %v461, %v459
  %v463 = vrsqrt.pop %v375
  %v464 = vmul.f32 %v375, %v463
  %vm465 = vcmp.eq.f32.partialorder %v375, inf
  %v466 = vsel %vm465, %v375, %v464
  %vm467 = vcmp.eq.f32.partialorder %v375, 0.0
  %v468 = vand.u32 %v375, 2147483648
  %v469 = vsel %vm467, %v468, %v466
  %v470 = vrsqrt.pop %v376
  %v471 = vmul.f32 %v376, %v470
  %vm472 = vcmp.eq.f32.partialorder %v376, inf
  %v473 = vsel %vm472, %v376, %v471
  %vm474 = vcmp.eq.f32.partialorder %v376, 0.0
  %v475 = vand.u32 %v376, 2147483648
  %v476 = vsel %vm474, %v475, %v473
  %v477 = vrsqrt.pop %v377
  %v478 = vmul.f32 %v377, %v477
  %vm479 = vcmp.eq.f32.partialorder %v377, inf
  %v480 = vsel %vm479, %v377, %v478
  %vm481 = vcmp.eq.f32.partialorder %v377, 0.0
  %v482 = vand.u32 %v377, 2147483648
  %v483 = vsel %vm481, %v482, %v480
  %v484 = vrsqrt.pop %v378
  %v485 = vmul.f32 %v378, %v484
  %vm486 = vcmp.eq.f32.partialorder %v378, inf
  %v487 = vsel %vm486, %v378, %v485
  %vm488 = vcmp.eq.f32.partialorder %v378, 0.0
  %v489 = vand.u32 %v378, 2147483648
  %v490 = vsel %vm488, %v489, %v487
  %v491 = vmul.f32 %v17, %v17
  %v492 = vmul.f32 %v18, %v18
  %v493 = vmul.f32 %v19, %v19
  %v494 = vmul.f32 %v20, %v20
  %v495 = vmul.f32 %v21, %v21
  %v496 = vmul.f32 %v22, %v22
  %v497 = vmul.f32 %v23, %v23
  %v498 = vmul.f32 %v24, %v24
  %v499 = vmul.f32 %v25, %v25
  %v500 = vmul.f32 %v26, %v26
  %v501 = vmul.f32 %v27, %v27
  %v502 = vmul.f32 %v28, %v28
  %v503 = vmul.f32 %v29, %v29
  %v504 = vmul.f32 %v30, %v30
  %v505 = vmul.f32 %v31, %v31
  %v506 = vmul.f32 %v32, %v32
  %507 = vadd.xlane.f32.xlu0 %v491
  %v508 = vpop.xlane.xlu0 %507
  %509 = vadd.xlane.f32.xlu0 %v492
  %v510 = vpop.xlane.xlu0 %509
  %511 = vadd.xlane.f32.xlu0 %v493
  %v512 = vpop.xlane.xlu0 %511
  %513 = vadd.xlane.f32.xlu0 %v494
  %v514 = vpop.xlane.xlu0 %513
  %515 = vadd.xlane.f32.xlu0 %v495
  %v516 = vpop.xlane.xlu0 %515
  %517 = vadd.xlane.f32.xlu0 %v496
  %v518 = vpop.xlane.xlu0 %517
  %519 = vadd.xlane.f32.xlu0 %v497
  %v520 = vpop.xlane.xlu0 %519
  %521 = vadd.xlane.f32.xlu0 %v498
  %v522 = vpop.xlane.xlu0 %521
  %523 = vadd.xlane.f32.xlu0 %v499
  %v524 = vpop.xlane.xlu0 %523
  %525 = vadd.xlane.f32.xlu0 %v500
  %v526 = vpop.xlane.xlu0 %525
  %527 = vadd.xlane.f32.xlu0 %v501
  %v528 = vpop.xlane.xlu0 %527
  %529 = vadd.xlane.f32.xlu0 %v502
  %v530 = vpop.xlane.xlu0 %529
  %531 = vadd.xlane.f32.xlu0 %v503
  %v532 = vpop.xlane.xlu0 %531
  %533 = vadd.xlane.f32.xlu0 %v504
  %v534 = vpop.xlane.xlu0 %533
  %535 = vadd.xlane.f32.xlu0 %v505
  %v536 = vpop.xlane.xlu0 %535
  %537 = vadd.xlane.f32.xlu0 %v506
  %v538 = vpop.xlane.xlu0 %537
  %v539 = vmax.f32 %v508, 1e-12
  %v540 = vmax.f32 %v510, 1e-12
  %v541 = vmax.f32 %v512, 1e-12
  %v542 = vmax.f32 %v514, 1e-12
  %v543 = vmax.f32 %v516, 1e-12
  %v544 = vmax.f32 %v518, 1e-12
  %v545 = vmax.f32 %v520, 1e-12
  %v546 = vmax.f32 %v522, 1e-12
  %v547 = vmax.f32 %v524, 1e-12
  %v548 = vmax.f32 %v526, 1e-12
  %v549 = vmax.f32 %v528, 1e-12
  %v550 = vmax.f32 %v530, 1e-12
  %v551 = vmax.f32 %v532, 1e-12
  %v552 = vmax.f32 %v534, 1e-12
  %v553 = vmax.f32 %v536, 1e-12
  %v554 = vmax.f32 %v538, 1e-12
  %v555 = vmul.f32 %v230, %v230
  %v556 = vmul.f32 %v235, %v235
  %v557 = vmul.f32 %v240, %v240
  %v558 = vmul.f32 %v245, %v245
  %v559 = vmul.f32 %v250, %v250
  %v560 = vmul.f32 %v255, %v255
  %v561 = vmul.f32 %v260, %v260
  %v562 = vmul.f32 %v265, %v265
  %v563 = vmul.f32 %v270, %v270
  %v564 = vmul.f32 %v275, %v275
  %v565 = vmul.f32 %v280, %v280
  %v566 = vmul.f32 %v285, %v285
  %v567 = vmul.f32 %v290, %v290
  %v568 = vmul.f32 %v295, %v295
  %v569 = vmul.f32 %v300, %v300
  %v570 = vmul.f32 %v305, %v305
  %571 = vadd.xlane.f32.xlu0 %v555
  %v572 = vpop.xlane.xlu0 %571
  %573 = vadd.xlane.f32.xlu0 %v556
  %v574 = vpop.xlane.xlu0 %573
  %575 = vadd.xlane.f32.xlu0 %v557
  %v576 = vpop.xlane.xlu0 %575
  %577 = vadd.xlane.f32.xlu0 %v558
  %v578 = vpop.xlane.xlu0 %577
  %579 = vadd.xlane.f32.xlu0 %v559
  %v580 = vpop.xlane.xlu0 %579
  %581 = vadd.xlane.f32.xlu0 %v560
  %v582 = vpop.xlane.xlu0 %581
  %583 = vadd.xlane.f32.xlu0 %v561
  %v584 = vpop.xlane.xlu0 %583
  %585 = vadd.xlane.f32.xlu0 %v562
  %v586 = vpop.xlane.xlu0 %585
  %587 = vadd.xlane.f32.xlu0 %v563
  %v588 = vpop.xlane.xlu0 %587
  %589 = vadd.xlane.f32.xlu0 %v564
  %v590 = vpop.xlane.xlu0 %589
  %591 = vadd.xlane.f32.xlu0 %v565
  %v592 = vpop.xlane.xlu0 %591
  %593 = vadd.xlane.f32.xlu0 %v566
  %v594 = vpop.xlane.xlu0 %593
  %595 = vadd.xlane.f32.xlu0 %v567
  %v596 = vpop.xlane.xlu0 %595
  %597 = vadd.xlane.f32.xlu0 %v568
  %v598 = vpop.xlane.xlu0 %597
  %599 = vadd.xlane.f32.xlu0 %v569
  %v600 = vpop.xlane.xlu0 %599
  %601 = vadd.xlane.f32.xlu0 %v570
  %v602 = vpop.xlane.xlu0 %601
  %v603 = vmax.f32 %v572, 1e-12
  %v604 = vmax.f32 %v574, 1e-12
  %v605 = vmax.f32 %v576, 1e-12
  %v606 = vmax.f32 %v578, 1e-12
  %v607 = vmax.f32 %v580, 1e-12
  %v608 = vmax.f32 %v582, 1e-12
  %v609 = vmax.f32 %v584, 1e-12
  %v610 = vmax.f32 %v586, 1e-12
  %v611 = vmax.f32 %v588, 1e-12
  %v612 = vmax.f32 %v590, 1e-12
  %v613 = vmax.f32 %v592, 1e-12
  %v614 = vmax.f32 %v594, 1e-12
  %v615 = vmax.f32 %v596, 1e-12
  %v616 = vmax.f32 %v598, 1e-12
  %v617 = vmax.f32 %v600, 1e-12
  %v618 = vmax.f32 %v602, 1e-12
  %v619 = vmul.f32 %v17, %v230
  %v620 = vmul.f32 %v18, %v235
  %v621 = vmul.f32 %v19, %v240
  %v622 = vmul.f32 %v20, %v245
  %v623 = vmul.f32 %v21, %v250
  %v624 = vmul.f32 %v22, %v255
  %v625 = vmul.f32 %v23, %v260
  %v626 = vmul.f32 %v24, %v265
  %v627 = vmul.f32 %v25, %v270
  %v628 = vmul.f32 %v26, %v275
  %v629 = vmul.f32 %v27, %v280
  %v630 = vmul.f32 %v28, %v285
  %v631 = vmul.f32 %v29, %v290
  %v632 = vmul.f32 %v30, %v295
  %v633 = vmul.f32 %v31, %v300
  %v634 = vmul.f32 %v32, %v305
  %635 = vadd.xlane.f32.xlu0 %v619
  %v636 = vpop.xlane.xlu0 %635
  %637 = vadd.xlane.f32.xlu0 %v620
  %v638 = vpop.xlane.xlu0 %637
  %639 = vadd.xlane.f32.xlu0 %v621
  %v640 = vpop.xlane.xlu0 %639
  %641 = vadd.xlane.f32.xlu0 %v622
  %v642 = vpop.xlane.xlu0 %641
  %643 = vadd.xlane.f32.xlu0 %v623
  %v644 = vpop.xlane.xlu0 %643
  %645 = vadd.xlane.f32.xlu0 %v624
  %v646 = vpop.xlane.xlu0 %645
  %647 = vadd.xlane.f32.xlu0 %v625
  %v648 = vpop.xlane.xlu0 %647
  %649 = vadd.xlane.f32.xlu0 %v626
  %v650 = vpop.xlane.xlu0 %649
  %651 = vadd.xlane.f32.xlu0 %v627
  %v652 = vpop.xlane.xlu0 %651
  %653 = vadd.xlane.f32.xlu0 %v628
  %v654 = vpop.xlane.xlu0 %653
  %655 = vadd.xlane.f32.xlu0 %v629
  %v656 = vpop.xlane.xlu0 %655
  %657 = vadd.xlane.f32.xlu0 %v630
  %v658 = vpop.xlane.xlu0 %657
  %659 = vadd.xlane.f32.xlu0 %v631
  %v660 = vpop.xlane.xlu0 %659
  %661 = vadd.xlane.f32.xlu0 %v632
  %v662 = vpop.xlane.xlu0 %661
  %663 = vadd.xlane.f32.xlu0 %v633
  %v664 = vpop.xlane.xlu0 %663
  %665 = vadd.xlane.f32.xlu0 %v634
  %v666 = vpop.xlane.xlu0 %665
  %v667 = vrsqrt.pop %v539
  %v668 = vmul.f32 %v539, %v667
  %vm669 = vcmp.eq.f32.partialorder %v539, inf
  %v670 = vsel %vm669, %v539, %v668
  %vm671 = vcmp.eq.f32.partialorder %v539, 0.0
  %v672 = vand.u32 %v539, 2147483648
  %v673 = vsel %vm671, %v672, %v670
  %v674 = vrsqrt.pop %v540
  %v675 = vmul.f32 %v540, %v674
  %vm676 = vcmp.eq.f32.partialorder %v540, inf
  %v677 = vsel %vm676, %v540, %v675
  %vm678 = vcmp.eq.f32.partialorder %v540, 0.0
  %v679 = vand.u32 %v540, 2147483648
  %v680 = vsel %vm678, %v679, %v677
  %v681 = vrsqrt.pop %v541
  %v682 = vmul.f32 %v541, %v681
  %vm683 = vcmp.eq.f32.partialorder %v541, inf
  %v684 = vsel %vm683, %v541, %v682
  %vm685 = vcmp.eq.f32.partialorder %v541, 0.0
  %v686 = vand.u32 %v541, 2147483648
  %v687 = vsel %vm685, %v686, %v684
  %v688 = vrsqrt.pop %v542
  %v689 = vmul.f32 %v542, %v688
  %vm690 = vcmp.eq.f32.partialorder %v542, inf
  %v691 = vsel %vm690, %v542, %v689
  %vm692 = vcmp.eq.f32.partialorder %v542, 0.0
  %v693 = vand.u32 %v542, 2147483648
  %v694 = vsel %vm692, %v693, %v691
  %v695 = vrsqrt.pop %v543
  %v696 = vmul.f32 %v543, %v695
  %vm697 = vcmp.eq.f32.partialorder %v543, inf
  %v698 = vsel %vm697, %v543, %v696
  %vm699 = vcmp.eq.f32.partialorder %v543, 0.0
  %v700 = vand.u32 %v543, 2147483648
  %v701 = vsel %vm699, %v700, %v698
  %v702 = vrsqrt.pop %v544
  %v703 = vmul.f32 %v544, %v702
  %vm704 = vcmp.eq.f32.partialorder %v544, inf
  %v705 = vsel %vm704, %v544, %v703
  %vm706 = vcmp.eq.f32.partialorder %v544, 0.0
  %v707 = vand.u32 %v544, 2147483648
  %v708 = vsel %vm706, %v707, %v705
  %v709 = vrsqrt.pop %v545
  %v710 = vmul.f32 %v545, %v709
  %vm711 = vcmp.eq.f32.partialorder %v545, inf
  %v712 = vsel %vm711, %v545, %v710
  %vm713 = vcmp.eq.f32.partialorder %v545, 0.0
  %v714 = vand.u32 %v545, 2147483648
  %v715 = vsel %vm713, %v714, %v712
  %v716 = vrsqrt.pop %v546
  %v717 = vmul.f32 %v546, %v716
  %vm718 = vcmp.eq.f32.partialorder %v546, inf
  %v719 = vsel %vm718, %v546, %v717
  %vm720 = vcmp.eq.f32.partialorder %v546, 0.0
  %v721 = vand.u32 %v546, 2147483648
  %v722 = vsel %vm720, %v721, %v719
  %v723 = vrsqrt.pop %v547
  %v724 = vmul.f32 %v547, %v723
  %vm725 = vcmp.eq.f32.partialorder %v547, inf
  %v726 = vsel %vm725, %v547, %v724
  %vm727 = vcmp.eq.f32.partialorder %v547, 0.0
  %v728 = vand.u32 %v547, 2147483648
  %v729 = vsel %vm727, %v728, %v726
  %v730 = vrsqrt.pop %v548
  %v731 = vmul.f32 %v548, %v730
  %vm732 = vcmp.eq.f32.partialorder %v548, inf
  %v733 = vsel %vm732, %v548, %v731
  %vm734 = vcmp.eq.f32.partialorder %v548, 0.0
  %v735 = vand.u32 %v548, 2147483648
  %v736 = vsel %vm734, %v735, %v733
  %v737 = vrsqrt.pop %v549
  %v738 = vmul.f32 %v549, %v737
  %vm739 = vcmp.eq.f32.partialorder %v549, inf
  %v740 = vsel %vm739, %v549, %v738
  %vm741 = vcmp.eq.f32.partialorder %v549, 0.0
  %v742 = vand.u32 %v549, 2147483648
  %v743 = vsel %vm741, %v742, %v740
  %v744 = vrsqrt.pop %v550
  %v745 = vmul.f32 %v550, %v744
  %vm746 = vcmp.eq.f32.partialorder %v550, inf
  %v747 = vsel %vm746, %v550, %v745
  %vm748 = vcmp.eq.f32.partialorder %v550, 0.0
  %v749 = vand.u32 %v550, 2147483648
  %v750 = vsel %vm748, %v749, %v747
  %v751 = vrsqrt.pop %v551
  %v752 = vmul.f32 %v551, %v751
  %vm753 = vcmp.eq.f32.partialorder %v551, inf
  %v754 = vsel %vm753, %v551, %v752
  %vm755 = vcmp.eq.f32.partialorder %v551, 0.0
  %v756 = vand.u32 %v551, 2147483648
  %v757 = vsel %vm755, %v756, %v754
  %v758 = vrsqrt.pop %v552
  %v759 = vmul.f32 %v552, %v758
  %vm760 = vcmp.eq.f32.partialorder %v552, inf
  %v761 = vsel %vm760, %v552, %v759
  %vm762 = vcmp.eq.f32.partialorder %v552, 0.0
  %v763 = vand.u32 %v552, 2147483648
  %v764 = vsel %vm762, %v763, %v761
  %v765 = vrsqrt.pop %v553
  %v766 = vmul.f32 %v553, %v765
  %vm767 = vcmp.eq.f32.partialorder %v553, inf
  %v768 = vsel %vm767, %v553, %v766
  %vm769 = vcmp.eq.f32.partialorder %v553, 0.0
  %v770 = vand.u32 %v553, 2147483648
  %v771 = vsel %vm769, %v770, %v768
  %v772 = vrsqrt.pop %v554
  %v773 = vmul.f32 %v554, %v772
  %vm774 = vcmp.eq.f32.partialorder %v554, inf
  %v775 = vsel %vm774, %v554, %v773
  %vm776 = vcmp.eq.f32.partialorder %v554, 0.0
  %v777 = vand.u32 %v554, 2147483648
  %v778 = vsel %vm776, %v777, %v775
  %v779 = vmul.f32 %v385, %v673
  %v780 = vmul.f32 %v392, %v680
  %v781 = vmul.f32 %v399, %v687
  %v782 = vmul.f32 %v406, %v694
  %v783 = vmul.f32 %v413, %v701
  %v784 = vmul.f32 %v420, %v708
  %v785 = vmul.f32 %v427, %v715
  %v786 = vmul.f32 %v434, %v722
  %v787 = vmul.f32 %v441, %v729
  %v788 = vmul.f32 %v448, %v736
  %v789 = vmul.f32 %v455, %v743
  %v790 = vmul.f32 %v462, %v750
  %v791 = vmul.f32 %v469, %v757
  %v792 = vmul.f32 %v476, %v764
  %v793 = vmul.f32 %v483, %v771
  %v794 = vmul.f32 %v490, %v778
  %v795 = vmax.f32 %v779, 1e-12
  %v796 = vmax.f32 %v780, 1e-12
  %v797 = vmax.f32 %v781, 1e-12
  %v798 = vmax.f32 %v782, 1e-12
  %v799 = vmax.f32 %v783, 1e-12
  %v800 = vmax.f32 %v784, 1e-12
  %v801 = vmax.f32 %v785, 1e-12
  %v802 = vmax.f32 %v786, 1e-12
  %v803 = vmax.f32 %v787, 1e-12
  %v804 = vmax.f32 %v788, 1e-12
  %v805 = vmax.f32 %v789, 1e-12
  %v806 = vmax.f32 %v790, 1e-12
  %v807 = vmax.f32 %v791, 1e-12
  %v808 = vmax.f32 %v792, 1e-12
  %v809 = vmax.f32 %v793, 1e-12
  %v810 = vmax.f32 %v794, 1e-12
  %v811 = vtanh.pop %v795
  %v812 = vtanh.pop %v796
  %v813 = vtanh.pop %v797
  %v814 = vtanh.pop %v798
  %v815 = vtanh.pop %v799
  %v816 = vtanh.pop %v800
  %v817 = vtanh.pop %v801
  %v818 = vtanh.pop %v802
  %v819 = vtanh.pop %v803
  %v820 = vtanh.pop %v804
  %v821 = vtanh.pop %v805
  %v822 = vtanh.pop %v806
  %v823 = vtanh.pop %v807
  %v824 = vtanh.pop %v808
  %v825 = vtanh.pop %v809
  %v826 = vtanh.pop %v810
  %v827 = vrcp.pop %v795
  %v828 = vrcp.pop %v796
  %v829 = vrcp.pop %v797
  %v830 = vrcp.pop %v798
  %v831 = vrcp.pop %v799
  %v832 = vrcp.pop %v800
  %v833 = vrcp.pop %v801
  %v834 = vrcp.pop %v802
  %v835 = vrcp.pop %v803
  %v836 = vrcp.pop %v804
  %v837 = vrcp.pop %v805
  %v838 = vrcp.pop %v806
  %v839 = vrcp.pop %v807
  %v840 = vrcp.pop %v808
  %v841 = vrcp.pop %v809
  %v842 = vrcp.pop %v810
  %v843 = vmul.f32 %v811, %v827
  %v844 = vmul.f32 %v812, %v828
  %v845 = vmul.f32 %v813, %v829
  %v846 = vmul.f32 %v814, %v830
  %v847 = vmul.f32 %v815, %v831
  %v848 = vmul.f32 %v816, %v832
  %v849 = vmul.f32 %v817, %v833
  %v850 = vmul.f32 %v818, %v834
  %v851 = vmul.f32 %v819, %v835
  %v852 = vmul.f32 %v820, %v836
  %v853 = vmul.f32 %v821, %v837
  %v854 = vmul.f32 %v822, %v838
  %v855 = vmul.f32 %v823, %v839
  %v856 = vmul.f32 %v824, %v840
  %v857 = vmul.f32 %v825, %v841
  %v858 = vmul.f32 %v826, %v842
  %v859 = vrsqrt.pop %v603
  %v860 = vmul.f32 %v603, %v859
  %vm861 = vcmp.eq.f32.partialorder %v603, inf
  %v862 = vsel %vm861, %v603, %v860
  %vm863 = vcmp.eq.f32.partialorder %v603, 0.0
  %v864 = vand.u32 %v603, 2147483648
  %v865 = vsel %vm863, %v864, %v862
  %v866 = vrsqrt.pop %v604
  %v867 = vmul.f32 %v604, %v866
  %vm868 = vcmp.eq.f32.partialorder %v604, inf
  %v869 = vsel %vm868, %v604, %v867
  %vm870 = vcmp.eq.f32.partialorder %v604, 0.0
  %v871 = vand.u32 %v604, 2147483648
  %v872 = vsel %vm870, %v871, %v869
  %v873 = vrsqrt.pop %v605
  %v874 = vmul.f32 %v605, %v873
  %vm875 = vcmp.eq.f32.partialorder %v605, inf
  %v876 = vsel %vm875, %v605, %v874
  %vm877 = vcmp.eq.f32.partialorder %v605, 0.0
  %v878 = vand.u32 %v605, 2147483648
  %v879 = vsel %vm877, %v878, %v876
  %v880 = vrsqrt.pop %v606
  %v881 = vmul.f32 %v606, %v880
  %vm882 = vcmp.eq.f32.partialorder %v606, inf
  %v883 = vsel %vm882, %v606, %v881
  %vm884 = vcmp.eq.f32.partialorder %v606, 0.0
  %v885 = vand.u32 %v606, 2147483648
  %v886 = vsel %vm884, %v885, %v883
  %v887 = vrsqrt.pop %v607
  %v888 = vmul.f32 %v607, %v887
  %vm889 = vcmp.eq.f32.partialorder %v607, inf
  %v890 = vsel %vm889, %v607, %v888
  %vm891 = vcmp.eq.f32.partialorder %v607, 0.0
  %v892 = vand.u32 %v607, 2147483648
  %v893 = vsel %vm891, %v892, %v890
  %v894 = vrsqrt.pop %v608
  %v895 = vmul.f32 %v608, %v894
  %vm896 = vcmp.eq.f32.partialorder %v608, inf
  %v897 = vsel %vm896, %v608, %v895
  %vm898 = vcmp.eq.f32.partialorder %v608, 0.0
  %v899 = vand.u32 %v608, 2147483648
  %v900 = vsel %vm898, %v899, %v897
  %v901 = vrsqrt.pop %v609
  %v902 = vmul.f32 %v609, %v901
  %vm903 = vcmp.eq.f32.partialorder %v609, inf
  %v904 = vsel %vm903, %v609, %v902
  %vm905 = vcmp.eq.f32.partialorder %v609, 0.0
  %v906 = vand.u32 %v609, 2147483648
  %v907 = vsel %vm905, %v906, %v904
  %v908 = vrsqrt.pop %v610
  %v909 = vmul.f32 %v610, %v908
  %vm910 = vcmp.eq.f32.partialorder %v610, inf
  %v911 = vsel %vm910, %v610, %v909
  %vm912 = vcmp.eq.f32.partialorder %v610, 0.0
  %v913 = vand.u32 %v610, 2147483648
  %v914 = vsel %vm912, %v913, %v911
  %v915 = vrsqrt.pop %v611
  %v916 = vmul.f32 %v611, %v915
  %vm917 = vcmp.eq.f32.partialorder %v611, inf
  %v918 = vsel %vm917, %v611, %v916
  %vm919 = vcmp.eq.f32.partialorder %v611, 0.0
  %v920 = vand.u32 %v611, 2147483648
  %v921 = vsel %vm919, %v920, %v918
  %v922 = vrsqrt.pop %v612
  %v923 = vmul.f32 %v612, %v922
  %vm924 = vcmp.eq.f32.partialorder %v612, inf
  %v925 = vsel %vm924, %v612, %v923
  %vm926 = vcmp.eq.f32.partialorder %v612, 0.0
  %v927 = vand.u32 %v612, 2147483648
  %v928 = vsel %vm926, %v927, %v925
  %v929 = vrsqrt.pop %v613
  %v930 = vmul.f32 %v613, %v929
  %vm931 = vcmp.eq.f32.partialorder %v613, inf
  %v932 = vsel %vm931, %v613, %v930
  %vm933 = vcmp.eq.f32.partialorder %v613, 0.0
  %v934 = vand.u32 %v613, 2147483648
  %v935 = vsel %vm933, %v934, %v932
  %v936 = vrsqrt.pop %v614
  %v937 = vmul.f32 %v614, %v936
  %vm938 = vcmp.eq.f32.partialorder %v614, inf
  %v939 = vsel %vm938, %v614, %v937
  %vm940 = vcmp.eq.f32.partialorder %v614, 0.0
  %v941 = vand.u32 %v614, 2147483648
  %v942 = vsel %vm940, %v941, %v939
  %v943 = vrsqrt.pop %v615
  %v944 = vmul.f32 %v615, %v943
  %vm945 = vcmp.eq.f32.partialorder %v615, inf
  %v946 = vsel %vm945, %v615, %v944
  %vm947 = vcmp.eq.f32.partialorder %v615, 0.0
  %v948 = vand.u32 %v615, 2147483648
  %v949 = vsel %vm947, %v948, %v946
  %v950 = vrsqrt.pop %v616
  %v951 = vmul.f32 %v616, %v950
  %vm952 = vcmp.eq.f32.partialorder %v616, inf
  %v953 = vsel %vm952, %v616, %v951
  %vm954 = vcmp.eq.f32.partialorder %v616, 0.0
  %v955 = vand.u32 %v616, 2147483648
  %v956 = vsel %vm954, %v955, %v953
  %v957 = vrsqrt.pop %v617
  %v958 = vmul.f32 %v617, %v957
  %vm959 = vcmp.eq.f32.partialorder %v617, inf
  %v960 = vsel %vm959, %v617, %v958
  %vm961 = vcmp.eq.f32.partialorder %v617, 0.0
  %v962 = vand.u32 %v617, 2147483648
  %v963 = vsel %vm961, %v962, %v960
  %v964 = vrsqrt.pop %v618
  %v965 = vmul.f32 %v618, %v964
  %vm966 = vcmp.eq.f32.partialorder %v618, inf
  %v967 = vsel %vm966, %v618, %v965
  %vm968 = vcmp.eq.f32.partialorder %v618, 0.0
  %v969 = vand.u32 %v618, 2147483648
  %v970 = vsel %vm968, %v969, %v967
  %v971 = vmul.f32 %v385, %v865
  %v972 = vmul.f32 %v392, %v872
  %v973 = vmul.f32 %v399, %v879
  %v974 = vmul.f32 %v406, %v886
  %v975 = vmul.f32 %v413, %v893
  %v976 = vmul.f32 %v420, %v900
  %v977 = vmul.f32 %v427, %v907
  %v978 = vmul.f32 %v434, %v914
  %v979 = vmul.f32 %v441, %v921
  %v980 = vmul.f32 %v448, %v928
  %v981 = vmul.f32 %v455, %v935
  %v982 = vmul.f32 %v462, %v942
  %v983 = vmul.f32 %v469, %v949
  %v984 = vmul.f32 %v476, %v956
  %v985 = vmul.f32 %v483, %v963
  %v986 = vmul.f32 %v490, %v970
  %v987 = vmax.f32 %v971, 1e-12
  %v988 = vmax.f32 %v972, 1e-12
  %v989 = vmax.f32 %v973, 1e-12
  %v990 = vmax.f32 %v974, 1e-12
  %v991 = vmax.f32 %v975, 1e-12
  %v992 = vmax.f32 %v976, 1e-12
  %v993 = vmax.f32 %v977, 1e-12
  %v994 = vmax.f32 %v978, 1e-12
  %v995 = vmax.f32 %v979, 1e-12
  %v996 = vmax.f32 %v980, 1e-12
  %v997 = vmax.f32 %v981, 1e-12
  %v998 = vmax.f32 %v982, 1e-12
  %v999 = vmax.f32 %v983, 1e-12
  %v1000 = vmax.f32 %v984, 1e-12
  %v1001 = vmax.f32 %v985, 1e-12
  %v1002 = vmax.f32 %v986, 1e-12
  %v1003 = vtanh.pop %v987
  %v1004 = vtanh.pop %v988
  %v1005 = vtanh.pop %v989
  %v1006 = vtanh.pop %v990
  %v1007 = vtanh.pop %v991
  %v1008 = vtanh.pop %v992
  %v1009 = vtanh.pop %v993
  %v1010 = vtanh.pop %v994
  %v1011 = vtanh.pop %v995
  %v1012 = vtanh.pop %v996
  %v1013 = vtanh.pop %v997
  %v1014 = vtanh.pop %v998
  %v1015 = vtanh.pop %v999
  %v1016 = vtanh.pop %v1000
  %v1017 = vtanh.pop %v1001
  %v1018 = vtanh.pop %v1002
  %v1019 = vrcp.pop %v987
  %v1020 = vrcp.pop %v988
  %v1021 = vrcp.pop %v989
  %v1022 = vrcp.pop %v990
  %v1023 = vrcp.pop %v991
  %v1024 = vrcp.pop %v992
  %v1025 = vrcp.pop %v993
  %v1026 = vrcp.pop %v994
  %v1027 = vrcp.pop %v995
  %v1028 = vrcp.pop %v996
  %v1029 = vrcp.pop %v997
  %v1030 = vrcp.pop %v998
  %v1031 = vrcp.pop %v999
  %v1032 = vrcp.pop %v1000
  %v1033 = vrcp.pop %v1001
  %v1034 = vrcp.pop %v1002
  %v1035 = vmul.f32 %v1003, %v1019
  %v1036 = vmul.f32 %v1004, %v1020
  %v1037 = vmul.f32 %v1005, %v1021
  %v1038 = vmul.f32 %v1006, %v1022
  %v1039 = vmul.f32 %v1007, %v1023
  %v1040 = vmul.f32 %v1008, %v1024
  %v1041 = vmul.f32 %v1009, %v1025
  %v1042 = vmul.f32 %v1010, %v1026
  %v1043 = vmul.f32 %v1011, %v1027
  %v1044 = vmul.f32 %v1012, %v1028
  %v1045 = vmul.f32 %v1013, %v1029
  %v1046 = vmul.f32 %v1014, %v1030
  %v1047 = vmul.f32 %v1015, %v1031
  %v1048 = vmul.f32 %v1016, %v1032
  %v1049 = vmul.f32 %v1017, %v1033
  %v1050 = vmul.f32 %v1018, %v1034
  %v1051 = vmul.f32 %v843, %v843
  %v1052 = vmul.f32 %v844, %v844
  %v1053 = vmul.f32 %v845, %v845
  %v1054 = vmul.f32 %v846, %v846
  %v1055 = vmul.f32 %v847, %v847
  %v1056 = vmul.f32 %v848, %v848
  %v1057 = vmul.f32 %v849, %v849
  %v1058 = vmul.f32 %v850, %v850
  %v1059 = vmul.f32 %v851, %v851
  %v1060 = vmul.f32 %v852, %v852
  %v1061 = vmul.f32 %v853, %v853
  %v1062 = vmul.f32 %v854, %v854
  %v1063 = vmul.f32 %v855, %v855
  %v1064 = vmul.f32 %v856, %v856
  %v1065 = vmul.f32 %v857, %v857
  %v1066 = vmul.f32 %v858, %v858
  %v1067 = vmul.f32 %v1051, %v539
  %v1068 = vmul.f32 %v1052, %v540
  %v1069 = vmul.f32 %v1053, %v541
  %v1070 = vmul.f32 %v1054, %v542
  %v1071 = vmul.f32 %v1055, %v543
  %v1072 = vmul.f32 %v1056, %v544
  %v1073 = vmul.f32 %v1057, %v545
  %v1074 = vmul.f32 %v1058, %v546
  %v1075 = vmul.f32 %v1059, %v547
  %v1076 = vmul.f32 %v1060, %v548
  %v1077 = vmul.f32 %v1061, %v549
  %v1078 = vmul.f32 %v1062, %v550
  %v1079 = vmul.f32 %v1063, %v551
  %v1080 = vmul.f32 %v1064, %v552
  %v1081 = vmul.f32 %v1065, %v553
  %v1082 = vmul.f32 %v1066, %v554
  %v1083 = vmul.f32 %v1035, %v1035
  %v1084 = vmul.f32 %v1036, %v1036
  %v1085 = vmul.f32 %v1037, %v1037
  %v1086 = vmul.f32 %v1038, %v1038
  %v1087 = vmul.f32 %v1039, %v1039
  %v1088 = vmul.f32 %v1040, %v1040
  %v1089 = vmul.f32 %v1041, %v1041
  %v1090 = vmul.f32 %v1042, %v1042
  %v1091 = vmul.f32 %v1043, %v1043
  %v1092 = vmul.f32 %v1044, %v1044
  %v1093 = vmul.f32 %v1045, %v1045
  %v1094 = vmul.f32 %v1046, %v1046
  %v1095 = vmul.f32 %v1047, %v1047
  %v1096 = vmul.f32 %v1048, %v1048
  %v1097 = vmul.f32 %v1049, %v1049
  %v1098 = vmul.f32 %v1050, %v1050
  %v1099 = vmul.f32 %v1083, %v603
  %v1100 = vmul.f32 %v1084, %v604
  %v1101 = vmul.f32 %v1085, %v605
  %v1102 = vmul.f32 %v1086, %v606
  %v1103 = vmul.f32 %v1087, %v607
  %v1104 = vmul.f32 %v1088, %v608
  %v1105 = vmul.f32 %v1089, %v609
  %v1106 = vmul.f32 %v1090, %v610
  %v1107 = vmul.f32 %v1091, %v611
  %v1108 = vmul.f32 %v1092, %v612
  %v1109 = vmul.f32 %v1093, %v613
  %v1110 = vmul.f32 %v1094, %v614
  %v1111 = vmul.f32 %v1095, %v615
  %v1112 = vmul.f32 %v1096, %v616
  %v1113 = vmul.f32 %v1097, %v617
  %v1114 = vmul.f32 %v1098, %v618
  %v1115 = vmul.f32 %v843, %v1035
  %v1116 = vmul.f32 %v844, %v1036
  %v1117 = vmul.f32 %v845, %v1037
  %v1118 = vmul.f32 %v846, %v1038
  %v1119 = vmul.f32 %v847, %v1039
  %v1120 = vmul.f32 %v848, %v1040
  %v1121 = vmul.f32 %v849, %v1041
  %v1122 = vmul.f32 %v850, %v1042
  %v1123 = vmul.f32 %v851, %v1043
  %v1124 = vmul.f32 %v852, %v1044
  %v1125 = vmul.f32 %v853, %v1045
  %v1126 = vmul.f32 %v854, %v1046
  %v1127 = vmul.f32 %v855, %v1047
  %v1128 = vmul.f32 %v856, %v1048
  %v1129 = vmul.f32 %v857, %v1049
  %v1130 = vmul.f32 %v858, %v1050
  %v1131 = vmul.f32 %v1115, %v636
  %v1132 = vmul.f32 %v1116, %v638
  %v1133 = vmul.f32 %v1117, %v640
  %v1134 = vmul.f32 %v1118, %v642
  %v1135 = vmul.f32 %v1119, %v644
  %v1136 = vmul.f32 %v1120, %v646
  %v1137 = vmul.f32 %v1121, %v648
  %v1138 = vmul.f32 %v1122, %v650
  %v1139 = vmul.f32 %v1123, %v652
  %v1140 = vmul.f32 %v1124, %v654
  %v1141 = vmul.f32 %v1125, %v656
  %v1142 = vmul.f32 %v1126, %v658
  %v1143 = vmul.f32 %v1127, %v660
  %v1144 = vmul.f32 %v1128, %v662
  %v1145 = vmul.f32 %v1129, %v664
  %v1146 = vmul.f32 %v1130, %v666
  %v1147 = vmul.f32 %v363, 2.0
  %v1148 = vmul.f32 %v364, 2.0
  %v1149 = vmul.f32 %v365, 2.0
  %v1150 = vmul.f32 %v366, 2.0
  %v1151 = vmul.f32 %v367, 2.0
  %v1152 = vmul.f32 %v368, 2.0
  %v1153 = vmul.f32 %v369, 2.0
  %v1154 = vmul.f32 %v370, 2.0
  %v1155 = vmul.f32 %v371, 2.0
  %v1156 = vmul.f32 %v372, 2.0
  %v1157 = vmul.f32 %v373, 2.0
  %v1158 = vmul.f32 %v374, 2.0
  %v1159 = vmul.f32 %v375, 2.0
  %v1160 = vmul.f32 %v376, 2.0
  %v1161 = vmul.f32 %v377, 2.0
  %v1162 = vmul.f32 %v378, 2.0
  %v1163 = vmul.f32 %v1147, %v1131
  %v1164 = vmul.f32 %v1148, %v1132
  %v1165 = vmul.f32 %v1149, %v1133
  %v1166 = vmul.f32 %v1150, %v1134
  %v1167 = vmul.f32 %v1151, %v1135
  %v1168 = vmul.f32 %v1152, %v1136
  %v1169 = vmul.f32 %v1153, %v1137
  %v1170 = vmul.f32 %v1154, %v1138
  %v1171 = vmul.f32 %v1155, %v1139
  %v1172 = vmul.f32 %v1156, %v1140
  %v1173 = vmul.f32 %v1157, %v1141
  %v1174 = vmul.f32 %v1158, %v1142
  %v1175 = vmul.f32 %v1159, %v1143
  %v1176 = vmul.f32 %v1160, %v1144
  %v1177 = vmul.f32 %v1161, %v1145
  %v1178 = vmul.f32 %v1162, %v1146
  %v1179 = vadd.f32 %v1163, 1.0
  %v1180 = vadd.f32 %v1164, 1.0
  %v1181 = vadd.f32 %v1165, 1.0
  %v1182 = vadd.f32 %v1166, 1.0
  %v1183 = vadd.f32 %v1167, 1.0
  %v1184 = vadd.f32 %v1168, 1.0
  %v1185 = vadd.f32 %v1169, 1.0
  %v1186 = vadd.f32 %v1170, 1.0
  %v1187 = vadd.f32 %v1171, 1.0
  %v1188 = vadd.f32 %v1172, 1.0
  %v1189 = vadd.f32 %v1173, 1.0
  %v1190 = vadd.f32 %v1174, 1.0
  %v1191 = vadd.f32 %v1175, 1.0
  %v1192 = vadd.f32 %v1176, 1.0
  %v1193 = vadd.f32 %v1177, 1.0
  %v1194 = vadd.f32 %v1178, 1.0
  %v1195 = vmul.f32 %v363, %v363
  %v1196 = vmul.f32 %v364, %v364
  %v1197 = vmul.f32 %v365, %v365
  %v1198 = vmul.f32 %v366, %v366
  %v1199 = vmul.f32 %v367, %v367
  %v1200 = vmul.f32 %v368, %v368
  %v1201 = vmul.f32 %v369, %v369
  %v1202 = vmul.f32 %v370, %v370
  %v1203 = vmul.f32 %v371, %v371
  %v1204 = vmul.f32 %v372, %v372
  %v1205 = vmul.f32 %v373, %v373
  %v1206 = vmul.f32 %v374, %v374
  %v1207 = vmul.f32 %v375, %v375
  %v1208 = vmul.f32 %v376, %v376
  %v1209 = vmul.f32 %v377, %v377
  %v1210 = vmul.f32 %v378, %v378
  %v1211 = vmul.f32 %v1195, %v1067
  %v1212 = vmul.f32 %v1196, %v1068
  %v1213 = vmul.f32 %v1197, %v1069
  %v1214 = vmul.f32 %v1198, %v1070
  %v1215 = vmul.f32 %v1199, %v1071
  %v1216 = vmul.f32 %v1200, %v1072
  %v1217 = vmul.f32 %v1201, %v1073
  %v1218 = vmul.f32 %v1202, %v1074
  %v1219 = vmul.f32 %v1203, %v1075
  %v1220 = vmul.f32 %v1204, %v1076
  %v1221 = vmul.f32 %v1205, %v1077
  %v1222 = vmul.f32 %v1206, %v1078
  %v1223 = vmul.f32 %v1207, %v1079
  %v1224 = vmul.f32 %v1208, %v1080
  %v1225 = vmul.f32 %v1209, %v1081
  %v1226 = vmul.f32 %v1210, %v1082
  %v1227 = vmul.f32 %v1211, %v1099
  %v1228 = vmul.f32 %v1212, %v1100
  %v1229 = vmul.f32 %v1213, %v1101
  %v1230 = vmul.f32 %v1214, %v1102
  %v1231 = vmul.f32 %v1215, %v1103
  %v1232 = vmul.f32 %v1216, %v1104
  %v1233 = vmul.f32 %v1217, %v1105
  %v1234 = vmul.f32 %v1218, %v1106
  %v1235 = vmul.f32 %v1219, %v1107
  %v1236 = vmul.f32 %v1220, %v1108
  %v1237 = vmul.f32 %v1221, %v1109
  %v1238 = vmul.f32 %v1222, %v1110
  %v1239 = vmul.f32 %v1223, %v1111
  %v1240 = vmul.f32 %v1224, %v1112
  %v1241 = vmul.f32 %v1225, %v1113
  %v1242 = vmul.f32 %v1226, %v1114
  %v1243 = vadd.f32 %v1179, %v1227
  %v1244 = vadd.f32 %v1180, %v1228
  %v1245 = vadd.f32 %v1181, %v1229
  %v1246 = vadd.f32 %v1182, %v1230
  %v1247 = vadd.f32 %v1183, %v1231
  %v1248 = vadd.f32 %v1184, %v1232
  %v1249 = vadd.f32 %v1185, %v1233
  %v1250 = vadd.f32 %v1186, %v1234
  %v1251 = vadd.f32 %v1187, %v1235
  %v1252 = vadd.f32 %v1188, %v1236
  %v1253 = vadd.f32 %v1189, %v1237
  %v1254 = vadd.f32 %v1190, %v1238
  %v1255 = vadd.f32 %v1191, %v1239
  %v1256 = vadd.f32 %v1192, %v1240
  %v1257 = vadd.f32 %v1193, %v1241
  %v1258 = vadd.f32 %v1194, %v1242
  %v1259 = vmax.f32 %v1243, 1e-12
  %v1260 = vmax.f32 %v1244, 1e-12
  %v1261 = vmax.f32 %v1245, 1e-12
  %v1262 = vmax.f32 %v1246, 1e-12
  %v1263 = vmax.f32 %v1247, 1e-12
  %v1264 = vmax.f32 %v1248, 1e-12
  %v1265 = vmax.f32 %v1249, 1e-12
  %v1266 = vmax.f32 %v1250, 1e-12
  %v1267 = vmax.f32 %v1251, 1e-12
  %v1268 = vmax.f32 %v1252, 1e-12
  %v1269 = vmax.f32 %v1253, 1e-12
  %v1270 = vmax.f32 %v1254, 1e-12
  %v1271 = vmax.f32 %v1255, 1e-12
  %v1272 = vmax.f32 %v1256, 1e-12
  %v1273 = vmax.f32 %v1257, 1e-12
  %v1274 = vmax.f32 %v1258, 1e-12
  %v1275 = vmul.f32 %v363, %v1099
  %v1276 = vmul.f32 %v364, %v1100
  %v1277 = vmul.f32 %v365, %v1101
  %v1278 = vmul.f32 %v366, %v1102
  %v1279 = vmul.f32 %v367, %v1103
  %v1280 = vmul.f32 %v368, %v1104
  %v1281 = vmul.f32 %v369, %v1105
  %v1282 = vmul.f32 %v370, %v1106
  %v1283 = vmul.f32 %v371, %v1107
  %v1284 = vmul.f32 %v372, %v1108
  %v1285 = vmul.f32 %v373, %v1109
  %v1286 = vmul.f32 %v374, %v1110
  %v1287 = vmul.f32 %v375, %v1111
  %v1288 = vmul.f32 %v376, %v1112
  %v1289 = vmul.f32 %v377, %v1113
  %v1290 = vmul.f32 %v378, %v1114
  %v1291 = vadd.f32 %v1179, %v1275
  %v1292 = vadd.f32 %v1180, %v1276
  %v1293 = vadd.f32 %v1181, %v1277
  %v1294 = vadd.f32 %v1182, %v1278
  %v1295 = vadd.f32 %v1183, %v1279
  %v1296 = vadd.f32 %v1184, %v1280
  %v1297 = vadd.f32 %v1185, %v1281
  %v1298 = vadd.f32 %v1186, %v1282
  %v1299 = vadd.f32 %v1187, %v1283
  %v1300 = vadd.f32 %v1188, %v1284
  %v1301 = vadd.f32 %v1189, %v1285
  %v1302 = vadd.f32 %v1190, %v1286
  %v1303 = vadd.f32 %v1191, %v1287
  %v1304 = vadd.f32 %v1192, %v1288
  %v1305 = vadd.f32 %v1193, %v1289
  %v1306 = vadd.f32 %v1194, %v1290
  %v1307 = vmul.f32 %v1291, %v843
  %v1308 = vmul.f32 %v1292, %v844
  %v1309 = vmul.f32 %v1293, %v845
  %v1310 = vmul.f32 %v1294, %v846
  %v1311 = vmul.f32 %v1295, %v847
  %v1312 = vmul.f32 %v1296, %v848
  %v1313 = vmul.f32 %v1297, %v849
  %v1314 = vmul.f32 %v1298, %v850
  %v1315 = vmul.f32 %v1299, %v851
  %v1316 = vmul.f32 %v1300, %v852
  %v1317 = vmul.f32 %v1301, %v853
  %v1318 = vmul.f32 %v1302, %v854
  %v1319 = vmul.f32 %v1303, %v855
  %v1320 = vmul.f32 %v1304, %v856
  %v1321 = vmul.f32 %v1305, %v857
  %v1322 = vmul.f32 %v1306, %v858
  %v1323 = vrcp.pop %v1259
  %v1324 = vmul.f32 %v1307, %v1323
  %v1325 = vrcp.pop %v1260
  %v1326 = vmul.f32 %v1308, %v1325
  %v1327 = vrcp.pop %v1261
  %v1328 = vmul.f32 %v1309, %v1327
  %v1329 = vrcp.pop %v1262
  %v1330 = vmul.f32 %v1310, %v1329
  %v1331 = vrcp.pop %v1263
  %v1332 = vmul.f32 %v1311, %v1331
  %v1333 = vrcp.pop %v1264
  %v1334 = vmul.f32 %v1312, %v1333
  %v1335 = vrcp.pop %v1265
  %v1336 = vmul.f32 %v1313, %v1335
  %v1337 = vrcp.pop %v1266
  %v1338 = vmul.f32 %v1314, %v1337
  %v1339 = vrcp.pop %v1267
  %v1340 = vmul.f32 %v1315, %v1339
  %v1341 = vrcp.pop %v1268
  %v1342 = vmul.f32 %v1316, %v1341
  %v1343 = vrcp.pop %v1269
  %v1344 = vmul.f32 %v1317, %v1343
  %v1345 = vrcp.pop %v1270
  %v1346 = vmul.f32 %v1318, %v1345
  %v1347 = vrcp.pop %v1271
  %v1348 = vmul.f32 %v1319, %v1347
  %v1349 = vrcp.pop %v1272
  %v1350 = vmul.f32 %v1320, %v1349
  %v1351 = vrcp.pop %v1273
  %v1352 = vmul.f32 %v1321, %v1351
  %v1353 = vrcp.pop %v1274
  %v1354 = vmul.f32 %v1322, %v1353
  %v1355 = vmul.f32 %v363, %v1067
  %v1356 = vmul.f32 %v364, %v1068
  %v1357 = vmul.f32 %v365, %v1069
  %v1358 = vmul.f32 %v366, %v1070
  %v1359 = vmul.f32 %v367, %v1071
  %v1360 = vmul.f32 %v368, %v1072
  %v1361 = vmul.f32 %v369, %v1073
  %v1362 = vmul.f32 %v370, %v1074
  %v1363 = vmul.f32 %v371, %v1075
  %v1364 = vmul.f32 %v372, %v1076
  %v1365 = vmul.f32 %v373, %v1077
  %v1366 = vmul.f32 %v374, %v1078
  %v1367 = vmul.f32 %v375, %v1079
  %v1368 = vmul.f32 %v376, %v1080
  %v1369 = vmul.f32 %v377, %v1081
  %v1370 = vmul.f32 %v378, %v1082
  %v1371 = vsub.f32 1.0, %v1355
  %v1372 = vsub.f32 1.0, %v1356
  %v1373 = vsub.f32 1.0, %v1357
  %v1374 = vsub.f32 1.0, %v1358
  %v1375 = vsub.f32 1.0, %v1359
  %v1376 = vsub.f32 1.0, %v1360
  %v1377 = vsub.f32 1.0, %v1361
  %v1378 = vsub.f32 1.0, %v1362
  %v1379 = vsub.f32 1.0, %v1363
  %v1380 = vsub.f32 1.0, %v1364
  %v1381 = vsub.f32 1.0, %v1365
  %v1382 = vsub.f32 1.0, %v1366
  %v1383 = vsub.f32 1.0, %v1367
  %v1384 = vsub.f32 1.0, %v1368
  %v1385 = vsub.f32 1.0, %v1369
  %v1386 = vsub.f32 1.0, %v1370
  %v1387 = vmul.f32 %v1371, %v1035
  %v1388 = vmul.f32 %v1372, %v1036
  %v1389 = vmul.f32 %v1373, %v1037
  %v1390 = vmul.f32 %v1374, %v1038
  %v1391 = vmul.f32 %v1375, %v1039
  %v1392 = vmul.f32 %v1376, %v1040
  %v1393 = vmul.f32 %v1377, %v1041
  %v1394 = vmul.f32 %v1378, %v1042
  %v1395 = vmul.f32 %v1379, %v1043
  %v1396 = vmul.f32 %v1380, %v1044
  %v1397 = vmul.f32 %v1381, %v1045
  %v1398 = vmul.f32 %v1382, %v1046
  %v1399 = vmul.f32 %v1383, %v1047
  %v1400 = vmul.f32 %v1384, %v1048
  %v1401 = vmul.f32 %v1385, %v1049
  %v1402 = vmul.f32 %v1386, %v1050
  %v1403 = vmul.f32 %v1387, %v1323
  %v1404 = vmul.f32 %v1388, %v1325
  %v1405 = vmul.f32 %v1389, %v1327
  %v1406 = vmul.f32 %v1390, %v1329
  %v1407 = vmul.f32 %v1391, %v1331
  %v1408 = vmul.f32 %v1392, %v1333
  %v1409 = vmul.f32 %v1393, %v1335
  %v1410 = vmul.f32 %v1394, %v1337
  %v1411 = vmul.f32 %v1395, %v1339
  %v1412 = vmul.f32 %v1396, %v1341
  %v1413 = vmul.f32 %v1397, %v1343
  %v1414 = vmul.f32 %v1398, %v1345
  %v1415 = vmul.f32 %v1399, %v1347
  %v1416 = vmul.f32 %v1400, %v1349
  %v1417 = vmul.f32 %v1401, %v1351
  %v1418 = vmul.f32 %v1402, %v1353
  %v1419 = vmul.f32 %v1324, %v1324
  %v1420 = vmul.f32 %v1326, %v1326
  %v1421 = vmul.f32 %v1328, %v1328
  %v1422 = vmul.f32 %v1330, %v1330
  %v1423 = vmul.f32 %v1332, %v1332
  %v1424 = vmul.f32 %v1334, %v1334
  %v1425 = vmul.f32 %v1336, %v1336
  %v1426 = vmul.f32 %v1338, %v1338
  %v1427 = vmul.f32 %v1340, %v1340
  %v1428 = vmul.f32 %v1342, %v1342
  %v1429 = vmul.f32 %v1344, %v1344
  %v1430 = vmul.f32 %v1346, %v1346
  %v1431 = vmul.f32 %v1348, %v1348
  %v1432 = vmul.f32 %v1350, %v1350
  %v1433 = vmul.f32 %v1352, %v1352
  %v1434 = vmul.f32 %v1354, %v1354
  %v1435 = vmul.f32 %v1419, %v539
  %v1436 = vmul.f32 %v1420, %v540
  %v1437 = vmul.f32 %v1421, %v541
  %v1438 = vmul.f32 %v1422, %v542
  %v1439 = vmul.f32 %v1423, %v543
  %v1440 = vmul.f32 %v1424, %v544
  %v1441 = vmul.f32 %v1425, %v545
  %v1442 = vmul.f32 %v1426, %v546
  %v1443 = vmul.f32 %v1427, %v547
  %v1444 = vmul.f32 %v1428, %v548
  %v1445 = vmul.f32 %v1429, %v549
  %v1446 = vmul.f32 %v1430, %v550
  %v1447 = vmul.f32 %v1431, %v551
  %v1448 = vmul.f32 %v1432, %v552
  %v1449 = vmul.f32 %v1433, %v553
  %v1450 = vmul.f32 %v1434, %v554
  %v1451 = vmul.f32 %v1324, 2.0
  %v1452 = vmul.f32 %v1326, 2.0
  %v1453 = vmul.f32 %v1328, 2.0
  %v1454 = vmul.f32 %v1330, 2.0
  %v1455 = vmul.f32 %v1332, 2.0
  %v1456 = vmul.f32 %v1334, 2.0
  %v1457 = vmul.f32 %v1336, 2.0
  %v1458 = vmul.f32 %v1338, 2.0
  %v1459 = vmul.f32 %v1340, 2.0
  %v1460 = vmul.f32 %v1342, 2.0
  %v1461 = vmul.f32 %v1344, 2.0
  %v1462 = vmul.f32 %v1346, 2.0
  %v1463 = vmul.f32 %v1348, 2.0
  %v1464 = vmul.f32 %v1350, 2.0
  %v1465 = vmul.f32 %v1352, 2.0
  %v1466 = vmul.f32 %v1354, 2.0
  %v1467 = vmul.f32 %v1451, %v1403
  %v1468 = vmul.f32 %v1452, %v1404
  %v1469 = vmul.f32 %v1453, %v1405
  %v1470 = vmul.f32 %v1454, %v1406
  %v1471 = vmul.f32 %v1455, %v1407
  %v1472 = vmul.f32 %v1456, %v1408
  %v1473 = vmul.f32 %v1457, %v1409
  %v1474 = vmul.f32 %v1458, %v1410
  %v1475 = vmul.f32 %v1459, %v1411
  %v1476 = vmul.f32 %v1460, %v1412
  %v1477 = vmul.f32 %v1461, %v1413
  %v1478 = vmul.f32 %v1462, %v1414
  %v1479 = vmul.f32 %v1463, %v1415
  %v1480 = vmul.f32 %v1464, %v1416
  %v1481 = vmul.f32 %v1465, %v1417
  %v1482 = vmul.f32 %v1466, %v1418
  %v1483 = vmul.f32 %v1467, %v636
  %v1484 = vmul.f32 %v1468, %v638
  %v1485 = vmul.f32 %v1469, %v640
  %v1486 = vmul.f32 %v1470, %v642
  %v1487 = vmul.f32 %v1471, %v644
  %v1488 = vmul.f32 %v1472, %v646
  %v1489 = vmul.f32 %v1473, %v648
  %v1490 = vmul.f32 %v1474, %v650
  %v1491 = vmul.f32 %v1475, %v652
  %v1492 = vmul.f32 %v1476, %v654
  %v1493 = vmul.f32 %v1477, %v656
  %v1494 = vmul.f32 %v1478, %v658
  %v1495 = vmul.f32 %v1479, %v660
  %v1496 = vmul.f32 %v1480, %v662
  %v1497 = vmul.f32 %v1481, %v664
  %v1498 = vmul.f32 %v1482, %v666
  %v1499 = vadd.f32 %v1435, %v1483
  %v1500 = vadd.f32 %v1436, %v1484
  %v1501 = vadd.f32 %v1437, %v1485
  %v1502 = vadd.f32 %v1438, %v1486
  %v1503 = vadd.f32 %v1439, %v1487
  %v1504 = vadd.f32 %v1440, %v1488
  %v1505 = vadd.f32 %v1441, %v1489
  %v1506 = vadd.f32 %v1442, %v1490
  %v1507 = vadd.f32 %v1443, %v1491
  %v1508 = vadd.f32 %v1444, %v1492
  %v1509 = vadd.f32 %v1445, %v1493
  %v1510 = vadd.f32 %v1446, %v1494
  %v1511 = vadd.f32 %v1447, %v1495
  %v1512 = vadd.f32 %v1448, %v1496
  %v1513 = vadd.f32 %v1449, %v1497
  %v1514 = vadd.f32 %v1450, %v1498
  %v1515 = vmul.f32 %v1403, %v1403
  %v1516 = vmul.f32 %v1404, %v1404
  %v1517 = vmul.f32 %v1405, %v1405
  %v1518 = vmul.f32 %v1406, %v1406
  %v1519 = vmul.f32 %v1407, %v1407
  %v1520 = vmul.f32 %v1408, %v1408
  %v1521 = vmul.f32 %v1409, %v1409
  %v1522 = vmul.f32 %v1410, %v1410
  %v1523 = vmul.f32 %v1411, %v1411
  %v1524 = vmul.f32 %v1412, %v1412
  %v1525 = vmul.f32 %v1413, %v1413
  %v1526 = vmul.f32 %v1414, %v1414
  %v1527 = vmul.f32 %v1415, %v1415
  %v1528 = vmul.f32 %v1416, %v1416
  %v1529 = vmul.f32 %v1417, %v1417
  %v1530 = vmul.f32 %v1418, %v1418
  %v1531 = vmul.f32 %v1515, %v603
  %v1532 = vmul.f32 %v1516, %v604
  %v1533 = vmul.f32 %v1517, %v605
  %v1534 = vmul.f32 %v1518, %v606
  %v1535 = vmul.f32 %v1519, %v607
  %v1536 = vmul.f32 %v1520, %v608
  %v1537 = vmul.f32 %v1521, %v609
  %v1538 = vmul.f32 %v1522, %v610
  %v1539 = vmul.f32 %v1523, %v611
  %v1540 = vmul.f32 %v1524, %v612
  %v1541 = vmul.f32 %v1525, %v613
  %v1542 = vmul.f32 %v1526, %v614
  %v1543 = vmul.f32 %v1527, %v615
  %v1544 = vmul.f32 %v1528, %v616
  %v1545 = vmul.f32 %v1529, %v617
  %v1546 = vmul.f32 %v1530, %v618
  %v1547 = vadd.f32 %v1499, %v1531
  %v1548 = vadd.f32 %v1500, %v1532
  %v1549 = vadd.f32 %v1501, %v1533
  %v1550 = vadd.f32 %v1502, %v1534
  %v1551 = vadd.f32 %v1503, %v1535
  %v1552 = vadd.f32 %v1504, %v1536
  %v1553 = vadd.f32 %v1505, %v1537
  %v1554 = vadd.f32 %v1506, %v1538
  %v1555 = vadd.f32 %v1507, %v1539
  %v1556 = vadd.f32 %v1508, %v1540
  %v1557 = vadd.f32 %v1509, %v1541
  %v1558 = vadd.f32 %v1510, %v1542
  %v1559 = vadd.f32 %v1511, %v1543
  %v1560 = vadd.f32 %v1512, %v1544
  %v1561 = vadd.f32 %v1513, %v1545
  %v1562 = vadd.f32 %v1514, %v1546
  %v1563 = vmax.f32 %v1547, 1e-12
  %v1564 = vmax.f32 %v1548, 1e-12
  %v1565 = vmax.f32 %v1549, 1e-12
  %v1566 = vmax.f32 %v1550, 1e-12
  %v1567 = vmax.f32 %v1551, 1e-12
  %v1568 = vmax.f32 %v1552, 1e-12
  %v1569 = vmax.f32 %v1553, 1e-12
  %v1570 = vmax.f32 %v1554, 1e-12
  %v1571 = vmax.f32 %v1555, 1e-12
  %v1572 = vmax.f32 %v1556, 1e-12
  %v1573 = vmax.f32 %v1557, 1e-12
  %v1574 = vmax.f32 %v1558, 1e-12
  %v1575 = vmax.f32 %v1559, 1e-12
  %v1576 = vmax.f32 %v1560, 1e-12
  %v1577 = vmax.f32 %v1561, 1e-12
  %v1578 = vmax.f32 %v1562, 1e-12
  %v1579 = vrsqrt.pop %v1563
  %v1580 = vmul.f32 %v1563, %v1579
  %vm1581 = vcmp.eq.f32.partialorder %v1563, inf
  %v1582 = vsel %vm1581, %v1563, %v1580
  %vm1583 = vcmp.eq.f32.partialorder %v1563, 0.0
  %v1584 = vand.u32 %v1563, 2147483648
  %v1585 = vsel %vm1583, %v1584, %v1582
  %v1586 = vrsqrt.pop %v1564
  %v1587 = vmul.f32 %v1564, %v1586
  %vm1588 = vcmp.eq.f32.partialorder %v1564, inf
  %v1589 = vsel %vm1588, %v1564, %v1587
  %vm1590 = vcmp.eq.f32.partialorder %v1564, 0.0
  %v1591 = vand.u32 %v1564, 2147483648
  %v1592 = vsel %vm1590, %v1591, %v1589
  %v1593 = vrsqrt.pop %v1565
  %v1594 = vmul.f32 %v1565, %v1593
  %vm1595 = vcmp.eq.f32.partialorder %v1565, inf
  %v1596 = vsel %vm1595, %v1565, %v1594
  %vm1597 = vcmp.eq.f32.partialorder %v1565, 0.0
  %v1598 = vand.u32 %v1565, 2147483648
  %v1599 = vsel %vm1597, %v1598, %v1596
  %v1600 = vrsqrt.pop %v1566
  %v1601 = vmul.f32 %v1566, %v1600
  %vm1602 = vcmp.eq.f32.partialorder %v1566, inf
  %v1603 = vsel %vm1602, %v1566, %v1601
  %vm1604 = vcmp.eq.f32.partialorder %v1566, 0.0
  %v1605 = vand.u32 %v1566, 2147483648
  %v1606 = vsel %vm1604, %v1605, %v1603
  %v1607 = vrsqrt.pop %v1567
  %v1608 = vmul.f32 %v1567, %v1607
  %vm1609 = vcmp.eq.f32.partialorder %v1567, inf
  %v1610 = vsel %vm1609, %v1567, %v1608
  %vm1611 = vcmp.eq.f32.partialorder %v1567, 0.0
  %v1612 = vand.u32 %v1567, 2147483648
  %v1613 = vsel %vm1611, %v1612, %v1610
  %v1614 = vrsqrt.pop %v1568
  %v1615 = vmul.f32 %v1568, %v1614
  %vm1616 = vcmp.eq.f32.partialorder %v1568, inf
  %v1617 = vsel %vm1616, %v1568, %v1615
  %vm1618 = vcmp.eq.f32.partialorder %v1568, 0.0
  %v1619 = vand.u32 %v1568, 2147483648
  %v1620 = vsel %vm1618, %v1619, %v1617
  %v1621 = vrsqrt.pop %v1569
  %v1622 = vmul.f32 %v1569, %v1621
  %vm1623 = vcmp.eq.f32.partialorder %v1569, inf
  %v1624 = vsel %vm1623, %v1569, %v1622
  %vm1625 = vcmp.eq.f32.partialorder %v1569, 0.0
  %v1626 = vand.u32 %v1569, 2147483648
  %v1627 = vsel %vm1625, %v1626, %v1624
  %v1628 = vrsqrt.pop %v1570
  %v1629 = vmul.f32 %v1570, %v1628
  %vm1630 = vcmp.eq.f32.partialorder %v1570, inf
  %v1631 = vsel %vm1630, %v1570, %v1629
  %vm1632 = vcmp.eq.f32.partialorder %v1570, 0.0
  %v1633 = vand.u32 %v1570, 2147483648
  %v1634 = vsel %vm1632, %v1633, %v1631
  %v1635 = vrsqrt.pop %v1571
  %v1636 = vmul.f32 %v1571, %v1635
  %vm1637 = vcmp.eq.f32.partialorder %v1571, inf
  %v1638 = vsel %vm1637, %v1571, %v1636
  %vm1639 = vcmp.eq.f32.partialorder %v1571, 0.0
  %v1640 = vand.u32 %v1571, 2147483648
  %v1641 = vsel %vm1639, %v1640, %v1638
  %v1642 = vrsqrt.pop %v1572
  %v1643 = vmul.f32 %v1572, %v1642
  %vm1644 = vcmp.eq.f32.partialorder %v1572, inf
  %v1645 = vsel %vm1644, %v1572, %v1643
  %vm1646 = vcmp.eq.f32.partialorder %v1572, 0.0
  %v1647 = vand.u32 %v1572, 2147483648
  %v1648 = vsel %vm1646, %v1647, %v1645
  %v1649 = vrsqrt.pop %v1573
  %v1650 = vmul.f32 %v1573, %v1649
  %vm1651 = vcmp.eq.f32.partialorder %v1573, inf
  %v1652 = vsel %vm1651, %v1573, %v1650
  %vm1653 = vcmp.eq.f32.partialorder %v1573, 0.0
  %v1654 = vand.u32 %v1573, 2147483648
  %v1655 = vsel %vm1653, %v1654, %v1652
  %v1656 = vrsqrt.pop %v1574
  %v1657 = vmul.f32 %v1574, %v1656
  %vm1658 = vcmp.eq.f32.partialorder %v1574, inf
  %v1659 = vsel %vm1658, %v1574, %v1657
  %vm1660 = vcmp.eq.f32.partialorder %v1574, 0.0
  %v1661 = vand.u32 %v1574, 2147483648
  %v1662 = vsel %vm1660, %v1661, %v1659
  %v1663 = vrsqrt.pop %v1575
  %v1664 = vmul.f32 %v1575, %v1663
  %vm1665 = vcmp.eq.f32.partialorder %v1575, inf
  %v1666 = vsel %vm1665, %v1575, %v1664
  %vm1667 = vcmp.eq.f32.partialorder %v1575, 0.0
  %v1668 = vand.u32 %v1575, 2147483648
  %v1669 = vsel %vm1667, %v1668, %v1666
  %v1670 = vrsqrt.pop %v1576
  %v1671 = vmul.f32 %v1576, %v1670
  %vm1672 = vcmp.eq.f32.partialorder %v1576, inf
  %v1673 = vsel %vm1672, %v1576, %v1671
  %vm1674 = vcmp.eq.f32.partialorder %v1576, 0.0
  %v1675 = vand.u32 %v1576, 2147483648
  %v1676 = vsel %vm1674, %v1675, %v1673
  %v1677 = vrsqrt.pop %v1577
  %v1678 = vmul.f32 %v1577, %v1677
  %vm1679 = vcmp.eq.f32.partialorder %v1577, inf
  %v1680 = vsel %vm1679, %v1577, %v1678
  %vm1681 = vcmp.eq.f32.partialorder %v1577, 0.0
  %v1682 = vand.u32 %v1577, 2147483648
  %v1683 = vsel %vm1681, %v1682, %v1680
  %v1684 = vrsqrt.pop %v1578
  %v1685 = vmul.f32 %v1578, %v1684
  %vm1686 = vcmp.eq.f32.partialorder %v1578, inf
  %v1687 = vsel %vm1686, %v1578, %v1685
  %vm1688 = vcmp.eq.f32.partialorder %v1578, 0.0
  %v1689 = vand.u32 %v1578, 2147483648
  %v1690 = vsel %vm1688, %v1689, %v1687
  %v1691 = vmul.f32 %v385, %v1585
  %v1692 = vmul.f32 %v392, %v1592
  %v1693 = vmul.f32 %v399, %v1599
  %v1694 = vmul.f32 %v406, %v1606
  %v1695 = vmul.f32 %v413, %v1613
  %v1696 = vmul.f32 %v420, %v1620
  %v1697 = vmul.f32 %v427, %v1627
  %v1698 = vmul.f32 %v434, %v1634
  %v1699 = vmul.f32 %v441, %v1641
  %v1700 = vmul.f32 %v448, %v1648
  %v1701 = vmul.f32 %v455, %v1655
  %v1702 = vmul.f32 %v462, %v1662
  %v1703 = vmul.f32 %v469, %v1669
  %v1704 = vmul.f32 %v476, %v1676
  %v1705 = vmul.f32 %v483, %v1683
  %v1706 = vmul.f32 %v490, %v1690
  %v1707 = vmax.f32 %v1691, 1e-12
  %v1708 = vmax.f32 %v1692, 1e-12
  %v1709 = vmax.f32 %v1693, 1e-12
  %v1710 = vmax.f32 %v1694, 1e-12
  %v1711 = vmax.f32 %v1695, 1e-12
  %v1712 = vmax.f32 %v1696, 1e-12
  %v1713 = vmax.f32 %v1697, 1e-12
  %v1714 = vmax.f32 %v1698, 1e-12
  %v1715 = vmax.f32 %v1699, 1e-12
  %v1716 = vmax.f32 %v1700, 1e-12
  %v1717 = vmax.f32 %v1701, 1e-12
  %v1718 = vmax.f32 %v1702, 1e-12
  %v1719 = vmax.f32 %v1703, 1e-12
  %v1720 = vmax.f32 %v1704, 1e-12
  %v1721 = vmax.f32 %v1705, 1e-12
  %v1722 = vmax.f32 %v1706, 1e-12
  %v1723 = vmin.f32 %v1707, 0.999999
  %v1724 = vmin.f32 %v1708, 0.999999
  %v1725 = vmin.f32 %v1709, 0.999999
  %v1726 = vmin.f32 %v1710, 0.999999
  %v1727 = vmin.f32 %v1711, 0.999999
  %v1728 = vmin.f32 %v1712, 0.999999
  %v1729 = vmin.f32 %v1713, 0.999999
  %v1730 = vmin.f32 %v1714, 0.999999
  %v1731 = vmin.f32 %v1715, 0.999999
  %v1732 = vmin.f32 %v1716, 0.999999
  %v1733 = vmin.f32 %v1717, 0.999999
  %v1734 = vmin.f32 %v1718, 0.999999
  %v1735 = vmin.f32 %v1719, 0.999999
  %v1736 = vmin.f32 %v1720, 0.999999
  %v1737 = vmin.f32 %v1721, 0.999999
  %v1738 = vmin.f32 %v1722, 0.999999
  %v1739 = vadd.f32 %v1723, 1.0
  %v1740 = vadd.f32 %v1724, 1.0
  %v1741 = vadd.f32 %v1725, 1.0
  %v1742 = vadd.f32 %v1726, 1.0
  %v1743 = vadd.f32 %v1727, 1.0
  %v1744 = vadd.f32 %v1728, 1.0
  %v1745 = vadd.f32 %v1729, 1.0
  %v1746 = vadd.f32 %v1730, 1.0
  %v1747 = vadd.f32 %v1731, 1.0
  %v1748 = vadd.f32 %v1732, 1.0
  %v1749 = vadd.f32 %v1733, 1.0
  %v1750 = vadd.f32 %v1734, 1.0
  %v1751 = vadd.f32 %v1735, 1.0
  %v1752 = vadd.f32 %v1736, 1.0
  %v1753 = vadd.f32 %v1737, 1.0
  %v1754 = vadd.f32 %v1738, 1.0
  %v1755 = vsub.f32 1.0, %v1723
  %v1756 = vsub.f32 1.0, %v1724
  %v1757 = vsub.f32 1.0, %v1725
  %v1758 = vsub.f32 1.0, %v1726
  %v1759 = vsub.f32 1.0, %v1727
  %v1760 = vsub.f32 1.0, %v1728
  %v1761 = vsub.f32 1.0, %v1729
  %v1762 = vsub.f32 1.0, %v1730
  %v1763 = vsub.f32 1.0, %v1731
  %v1764 = vsub.f32 1.0, %v1732
  %v1765 = vsub.f32 1.0, %v1733
  %v1766 = vsub.f32 1.0, %v1734
  %v1767 = vsub.f32 1.0, %v1735
  %v1768 = vsub.f32 1.0, %v1736
  %v1769 = vsub.f32 1.0, %v1737
  %v1770 = vsub.f32 1.0, %v1738
  %v1771 = vrcp.pop %v1755
  %v1772 = vmul.f32 %v1739, %v1771
  %v1773 = vrcp.pop %v1756
  %v1774 = vmul.f32 %v1740, %v1773
  %v1775 = vrcp.pop %v1757
  %v1776 = vmul.f32 %v1741, %v1775
  %v1777 = vrcp.pop %v1758
  %v1778 = vmul.f32 %v1742, %v1777
  %v1779 = vrcp.pop %v1759
  %v1780 = vmul.f32 %v1743, %v1779
  %v1781 = vrcp.pop %v1760
  %v1782 = vmul.f32 %v1744, %v1781
  %v1783 = vrcp.pop %v1761
  %v1784 = vmul.f32 %v1745, %v1783
  %v1785 = vrcp.pop %v1762
  %v1786 = vmul.f32 %v1746, %v1785
  %v1787 = vrcp.pop %v1763
  %v1788 = vmul.f32 %v1747, %v1787
  %v1789 = vrcp.pop %v1764
  %v1790 = vmul.f32 %v1748, %v1789
  %v1791 = vrcp.pop %v1765
  %v1792 = vmul.f32 %v1749, %v1791
  %v1793 = vrcp.pop %v1766
  %v1794 = vmul.f32 %v1750, %v1793
  %v1795 = vrcp.pop %v1767
  %v1796 = vmul.f32 %v1751, %v1795
  %v1797 = vrcp.pop %v1768
  %v1798 = vmul.f32 %v1752, %v1797
  %v1799 = vrcp.pop %v1769
  %v1800 = vmul.f32 %v1753, %v1799
  %v1801 = vrcp.pop %v1770
  %v1802 = vmul.f32 %v1754, %v1801
  %v1803 = vlog2.pop %v1772
  %v1804 = vmul.f32 %v1803, 0.6931472
  %v1805 = vlog2.pop %v1774
  %v1806 = vmul.f32 %v1805, 0.6931472
  %v1807 = vlog2.pop %v1776
  %v1808 = vmul.f32 %v1807, 0.6931472
  %v1809 = vlog2.pop %v1778
  %v1810 = vmul.f32 %v1809, 0.6931472
  %v1811 = vlog2.pop %v1780
  %v1812 = vmul.f32 %v1811, 0.6931472
  %v1813 = vlog2.pop %v1782
  %v1814 = vmul.f32 %v1813, 0.6931472
  %v1815 = vlog2.pop %v1784
  %v1816 = vmul.f32 %v1815, 0.6931472
  %v1817 = vlog2.pop %v1786
  %v1818 = vmul.f32 %v1817, 0.6931472
  %v1819 = vlog2.pop %v1788
  %v1820 = vmul.f32 %v1819, 0.6931472
  %v1821 = vlog2.pop %v1790
  %v1822 = vmul.f32 %v1821, 0.6931472
  %v1823 = vlog2.pop %v1792
  %v1824 = vmul.f32 %v1823, 0.6931472
  %v1825 = vlog2.pop %v1794
  %v1826 = vmul.f32 %v1825, 0.6931472
  %v1827 = vlog2.pop %v1796
  %v1828 = vmul.f32 %v1827, 0.6931472
  %v1829 = vlog2.pop %v1798
  %v1830 = vmul.f32 %v1829, 0.6931472
  %v1831 = vlog2.pop %v1800
  %v1832 = vmul.f32 %v1831, 0.6931472
  %v1833 = vlog2.pop %v1802
  %v1834 = vmul.f32 %v1833, 0.6931472
  %v1835 = vmul.f32 %v1804, 0.5
  %v1836 = vmul.f32 %v1806, 0.5
  %v1837 = vmul.f32 %v1808, 0.5
  %v1838 = vmul.f32 %v1810, 0.5
  %v1839 = vmul.f32 %v1812, 0.5
  %v1840 = vmul.f32 %v1814, 0.5
  %v1841 = vmul.f32 %v1816, 0.5
  %v1842 = vmul.f32 %v1818, 0.5
  %v1843 = vmul.f32 %v1820, 0.5
  %v1844 = vmul.f32 %v1822, 0.5
  %v1845 = vmul.f32 %v1824, 0.5
  %v1846 = vmul.f32 %v1826, 0.5
  %v1847 = vmul.f32 %v1828, 0.5
  %v1848 = vmul.f32 %v1830, 0.5
  %v1849 = vmul.f32 %v1832, 0.5
  %v1850 = vmul.f32 %v1834, 0.5
  %v1851 = vrcp.pop %v1707
  %v1852 = vrcp.pop %v1708
  %v1853 = vrcp.pop %v1709
  %v1854 = vrcp.pop %v1710
  %v1855 = vrcp.pop %v1711
  %v1856 = vrcp.pop %v1712
  %v1857 = vrcp.pop %v1713
  %v1858 = vrcp.pop %v1714
  %v1859 = vrcp.pop %v1715
  %v1860 = vrcp.pop %v1716
  %v1861 = vrcp.pop %v1717
  %v1862 = vrcp.pop %v1718
  %v1863 = vrcp.pop %v1719
  %v1864 = vrcp.pop %v1720
  %v1865 = vrcp.pop %v1721
  %v1866 = vrcp.pop %v1722
  %v1867 = vmul.f32 %v1835, %v1851
  %v1868 = vmul.f32 %v1836, %v1852
  %v1869 = vmul.f32 %v1837, %v1853
  %v1870 = vmul.f32 %v1838, %v1854
  %v1871 = vmul.f32 %v1839, %v1855
  %v1872 = vmul.f32 %v1840, %v1856
  %v1873 = vmul.f32 %v1841, %v1857
  %v1874 = vmul.f32 %v1842, %v1858
  %v1875 = vmul.f32 %v1843, %v1859
  %v1876 = vmul.f32 %v1844, %v1860
  %v1877 = vmul.f32 %v1845, %v1861
  %v1878 = vmul.f32 %v1846, %v1862
  %v1879 = vmul.f32 %v1847, %v1863
  %v1880 = vmul.f32 %v1848, %v1864
  %v1881 = vmul.f32 %v1849, %v1865
  %v1882 = vmul.f32 %v1850, %v1866
  %v1883 = vmul.f32 %v1867, %v1324
  %v1884 = vmul.f32 %v1868, %v1326
  %v1885 = vmul.f32 %v1869, %v1328
  %v1886 = vmul.f32 %v1870, %v1330
  %v1887 = vmul.f32 %v1871, %v1332
  %v1888 = vmul.f32 %v1872, %v1334
  %v1889 = vmul.f32 %v1873, %v1336
  %v1890 = vmul.f32 %v1874, %v1338
  %v1891 = vmul.f32 %v1875, %v1340
  %v1892 = vmul.f32 %v1876, %v1342
  %v1893 = vmul.f32 %v1877, %v1344
  %v1894 = vmul.f32 %v1878, %v1346
  %v1895 = vmul.f32 %v1879, %v1348
  %v1896 = vmul.f32 %v1880, %v1350
  %v1897 = vmul.f32 %v1881, %v1352
  %v1898 = vmul.f32 %v1882, %v1354
  %v1899 = vmul.f32 %v1867, %v1403
  %v1900 = vmul.f32 %v1868, %v1404
  %v1901 = vmul.f32 %v1869, %v1405
  %v1902 = vmul.f32 %v1870, %v1406
  %v1903 = vmul.f32 %v1871, %v1407
  %v1904 = vmul.f32 %v1872, %v1408
  %v1905 = vmul.f32 %v1873, %v1409
  %v1906 = vmul.f32 %v1874, %v1410
  %v1907 = vmul.f32 %v1875, %v1411
  %v1908 = vmul.f32 %v1876, %v1412
  %v1909 = vmul.f32 %v1877, %v1413
  %v1910 = vmul.f32 %v1878, %v1414
  %v1911 = vmul.f32 %v1879, %v1415
  %v1912 = vmul.f32 %v1880, %v1416
  %v1913 = vmul.f32 %v1881, %v1417
  %v1914 = vmul.f32 %v1882, %v1418
  %v1915 = vmul.f32 %v1883, %v17
  %v1916 = vmul.f32 %v1884, %v18
  %v1917 = vmul.f32 %v1885, %v19
  %v1918 = vmul.f32 %v1886, %v20
  %v1919 = vmul.f32 %v1887, %v21
  %v1920 = vmul.f32 %v1888, %v22
  %v1921 = vmul.f32 %v1889, %v23
  %v1922 = vmul.f32 %v1890, %v24
  %v1923 = vmul.f32 %v1891, %v25
  %v1924 = vmul.f32 %v1892, %v26
  %v1925 = vmul.f32 %v1893, %v27
  %v1926 = vmul.f32 %v1894, %v28
  %v1927 = vmul.f32 %v1895, %v29
  %v1928 = vmul.f32 %v1896, %v30
  %v1929 = vmul.f32 %v1897, %v31
  %v1930 = vmul.f32 %v1898, %v32
  %v1931 = vmul.f32 %v1899, %v230
  %v1932 = vmul.f32 %v1900, %v235
  %v1933 = vmul.f32 %v1901, %v240
  %v1934 = vmul.f32 %v1902, %v245
  %v1935 = vmul.f32 %v1903, %v250
  %v1936 = vmul.f32 %v1904, %v255
  %v1937 = vmul.f32 %v1905, %v260
  %v1938 = vmul.f32 %v1906, %v265
  %v1939 = vmul.f32 %v1907, %v270
  %v1940 = vmul.f32 %v1908, %v275
  %v1941 = vmul.f32 %v1909, %v280
  %v1942 = vmul.f32 %v1910, %v285
  %v1943 = vmul.f32 %v1911, %v290
  %v1944 = vmul.f32 %v1912, %v295
  %v1945 = vmul.f32 %v1913, %v300
  %v1946 = vmul.f32 %v1914, %v305
  %v1947 = vadd.f32 %v1915, %v1931
  %v1948 = vadd.f32 %v1916, %v1932
  %v1949 = vadd.f32 %v1917, %v1933
  %v1950 = vadd.f32 %v1918, %v1934
  %v1951 = vadd.f32 %v1919, %v1935
  %v1952 = vadd.f32 %v1920, %v1936
  %v1953 = vadd.f32 %v1921, %v1937
  %v1954 = vadd.f32 %v1922, %v1938
  %v1955 = vadd.f32 %v1923, %v1939
  %v1956 = vadd.f32 %v1924, %v1940
  %v1957 = vadd.f32 %v1925, %v1941
  %v1958 = vadd.f32 %v1926, %v1942
  %v1959 = vadd.f32 %v1927, %v1943
  %v1960 = vadd.f32 %v1928, %v1944
  %v1961 = vadd.f32 %v1929, %v1945
  %v1962 = vadd.f32 %v1930, %v1946
  %vm1963 = vcmp.eq.s32.totalorder %v50, 32
  %v1964 = vsel %vm1963, 1.0, %v1947
  %v1965 = vsel %vm1963, 1.0, %v1948
  %v1966 = vsel %vm1963, 1.0, %v1949
  %v1967 = vsel %vm1963, 1.0, %v1950
  %v1968 = vsel %vm1963, 1.0, %v1951
  %v1969 = vsel %vm1963, 1.0, %v1952
  %v1970 = vsel %vm1963, 1.0, %v1953
  %v1971 = vsel %vm1963, 1.0, %v1954
  %v1972 = vsel %vm1963, 1.0, %v1955
  %v1973 = vsel %vm1963, 1.0, %v1956
  %v1974 = vsel %vm1963, 1.0, %v1957
  %v1975 = vsel %vm1963, 1.0, %v1958
  %v1976 = vsel %vm1963, 1.0, %v1959
  %v1977 = vsel %vm1963, 1.0, %v1960
  %v1978 = vsel %vm1963, 1.0, %v1961
  %v1979 = vsel %vm1963, 1.0, %v1962
  %v1980 = vpack.c.bf16 %v1965, %v1964
  %v1981 = vpack.c.bf16 %v1967, %v1966
  %v1982 = vpack.c.bf16 %v1969, %v1968
  %v1983 = vpack.c.bf16 %v1971, %v1970
  %v1984 = vpack.c.bf16 %v1973, %v1972
  %v1985 = vpack.c.bf16 %v1975, %v1974
  %v1986 = vpack.c.bf16 %v1977, %v1976
  %v1987 = vpack.c.bf16 %v1979, %v1978
  %v1996 = vunpack.c.l.b16 %v1980
  %v1997 = vunpack.c.h.b16 %v1980
  %v1998 = vunpack.c.l.b16 %v1981
  %v1999 = vunpack.c.h.b16 %v1981
  %v2000 = vunpack.c.l.b16 %v1982
  %v2001 = vunpack.c.h.b16 %v1982
  %v2002 = vunpack.c.l.b16 %v1983
  %v2003 = vunpack.c.h.b16 %v1983
  %v2004 = vunpack.c.l.b16 %v1984
  %v2005 = vunpack.c.h.b16 %v1984
  %v2006 = vunpack.c.l.b16 %v1985
  %v2007 = vunpack.c.h.b16 %v1985
  %v2008 = vunpack.c.l.b16 %v1986
  %v2009 = vunpack.c.h.b16 %v1986
  %v2010 = vunpack.c.l.b16 %v1987
  %v2011 = vunpack.c.h.b16 %v1987
  %v2012 = vpack.c.b16 %v1996, %v1996
  %v2013 = vpack.c.b16 %v1997, %v1997
  %v2014 = vpack.c.b16 %v1998, %v1998
  %v2015 = vpack.c.b16 %v1999, %v1999
  %v2016 = vpack.c.b16 %v2000, %v2000
  %v2017 = vpack.c.b16 %v2001, %v2001
  %v2018 = vpack.c.b16 %v2002, %v2002
  %v2019 = vpack.c.b16 %v2003, %v2003
  %v2020 = vpack.c.b16 %v2004, %v2004
  %v2021 = vpack.c.b16 %v2005, %v2005
  %v2022 = vpack.c.b16 %v2006, %v2006
  %v2023 = vpack.c.b16 %v2007, %v2007
  %v2024 = vpack.c.b16 %v2008, %v2008
  %v2025 = vpack.c.b16 %v2009, %v2009
  %v2026 = vpack.c.b16 %v2010, %v2010
  %v2027 = vpack.c.b16 %v2011, %v2011
  %2044 = vst [vmem:[%s4] sm:$0xf] %v2012
  %2045 = vst [vmem:[%s4 + $0x4] sm:$0xf] %v2013
  %2046 = vst [vmem:[%s4 + $0x8] sm:$0xf] %v2014
  %2047 = vst [vmem:[%s4 + $0xc] sm:$0xf] %v2015
  %2048 = vst [vmem:[%s4 + $0x10] sm:$0xf] %v2016
  %2049 = vst [vmem:[%s4 + $0x14] sm:$0xf] %v2017
  %2050 = vst [vmem:[%s4 + $0x18] sm:$0xf] %v2018
  %2051 = vst [vmem:[%s4 + $0x1c] sm:$0xf] %v2019
  %2052 = vst [vmem:[%s4 + $0x20] sm:$0xf] %v2020
  %2053 = vst [vmem:[%s4 + $0x24] sm:$0xf] %v2021
  %2054 = vst [vmem:[%s4 + $0x28] sm:$0xf] %v2022
  %2055 = vst [vmem:[%s4 + $0x2c] sm:$0xf] %v2023
  %2056 = vst [vmem:[%s4 + $0x30] sm:$0xf] %v2024
  %2057 = vst [vmem:[%s4 + $0x34] sm:$0xf] %v2025
  %2058 = vst [vmem:[%s4 + $0x38] sm:$0xf] %v2026
  %2059 = vst [vmem:[%s4 + $0x3c] sm:$0xf] %v2027
  // Predicated region
  $region18: #{hyperbolic_layer.2} parent=0 // pred_check
    _
  $region19: #{hyperbolic_layer.2} parent=0 // pred_check_branch
    %2061 = sbr.rel (0) target = $region21
  $region20: #{hyperbolic_layer.2} parent=0 // pred_region
    _
  $region21: #{hyperbolic_layer.2} parent=0 // pred_fallthru
    _
  // Predicated region
  $region22: #{hyperbolic_layer.2} parent=0 // pred_check
    _
  $region23: #{hyperbolic_layer.2} parent=0 // pred_check_branch
    %2063 = sbr.rel (0) target = $region25
  $region24: #{hyperbolic_layer.2} parent=0 // pred_region
    _
  $region25: #{hyperbolic_layer.2} parent=0 // pred_fallthru
    _

</llo_original>
